<compile_context>
chip_gen: v7x
topology: tpu7x:2x2x1
jax: 0.10.0
libtpu: 0.0.40
codegen_flags: <defaults>
</compile_context>

<pallas_src>
import functools
import math

import jax
import jax.numpy as jnp
from jax import lax
from jax.experimental import pallas as pl
from jax.experimental.pallas import tpu as pltpu


# ---------------------------------------------------------------------------
# Fused encoder-stack kernel body.
# Grid = (batch_blocks, n_layers); activation carried in VMEM scratch across layers.
# ---------------------------------------------------------------------------
def _encoder_stack_kernel(x_ref, pe_ref,
                          wqkv_ref, bqkv_ref, wo_ref, bo_ref,
                          w1_ref, b1_ref, w2_ref, b2_ref,
                          g1_ref, be1_ref, g2_ref, be2_ref,
                          o_ref, act_ref, *, nhead, b_blk, S, D):
    layer = pl.program_id(1)
    dh = D // nhead
    N = b_blk * S
    eps = 1e-5
    bf16 = jnp.bfloat16

    # --- layer 0: load activation block + fused positional-encoding add -------
    @pl.when(layer == 0)
    def _():
        x0 = x_ref[...] + pe_ref[...]                    # (b_blk, S, D) + (S, D)
        act_ref[...] = x0.reshape(N, D)

    x = act_ref[...]                                     # (N, D) f32

    # --- packed QKV projection: one lane-dense (N, D) @ (D, 3D) MXU pass ------
    # 1/sqrt(dh) is folded into the Q columns of Wqkv / bqkv on the host.
    qkv = jnp.dot(x.astype(bf16), wqkv_ref[0],
                  preferred_element_type=jnp.float32) + bqkv_ref[0]   # (N, 3D) f32

    # --- head split: post-matmul data movement only (tiny tensors) ------------
    # builds q/k/v with a single leading (batch*head) axis for the batched einsums.
    def split_heads(col_off):
        parts = []
        for b in range(b_blk):
            rows = qkv[b * S:(b + 1) * S]                              # (S, 3D)
            for h in range(nhead):
                parts.append(rows[:, col_off + h * dh: col_off + (h + 1) * dh])
        return jnp.stack(parts, axis=0)                                # (G, S, dh)

    q = split_heads(0).astype(bf16)
    k = split_heads(D).astype(bf16)
    v = split_heads(2 * D).astype(bf16)

    # --- scaled-dot-product attention, batched over (batch*head) --------------
    s = jnp.einsum("gqe,gke->gqk", q, k,
                   preferred_element_type=jnp.float32)                 # (G, S, S) f32
    s = s - jnp.max(s, axis=-1, keepdims=True)
    p = jnp.exp(s)
    p = p * pl.reciprocal(jnp.sum(p, axis=-1, keepdims=True), approx=True)
    ctx = jnp.einsum("gqk,gke->gqe", p.astype(bf16), v,
                     preferred_element_type=jnp.float32)               # (G, S, dh) f32

    # --- merge heads back to (N, D), then single D-deep output projection -----
    rows = []
    for b in range(b_blk):
        rows.append(jnp.concatenate(
            [ctx[b * nhead + h] for h in range(nhead)], axis=-1))      # (S, D)
    ctx2 = jnp.concatenate(rows, axis=0)                               # (N, D) f32

    src2 = jnp.dot(ctx2.astype(bf16), wo_ref[0],
                   preferred_element_type=jnp.float32) + bo_ref[0]     # (N, D) f32

    # --- residual + LayerNorm 1 (f32) -----------------------------------------
    y = x + src2
    mu = jnp.mean(y, axis=-1, keepdims=True)
    var = jnp.mean((y - mu) ** 2, axis=-1, keepdims=True)
    y = (y - mu) * lax.rsqrt(var + eps) * g1_ref[0] + be1_ref[0]

    # --- feed-forward (bf16 matmuls, f32 accumulate) ---------------------------
    h1 = jnp.dot(y.astype(bf16), w1_ref[0],
                 preferred_element_type=jnp.float32) + b1_ref[0]
    h1 = jnp.maximum(h1, 0.0)
    h2 = jnp.dot(h1.astype(bf16), w2_ref[0],
                 preferred_element_type=jnp.float32) + b2_ref[0]

    # --- residual + LayerNorm 2 (f32) ------------------------------------------
    z = y + h2
    mu2 = jnp.mean(z, axis=-1, keepdims=True)
    var2 = jnp.mean((z - mu2) ** 2, axis=-1, keepdims=True)
    z = (z - mu2) * lax.rsqrt(var2 + eps) * g2_ref[0] + be2_ref[0]

    act_ref[...] = z                                     # carry to next layer

    @pl.when(layer == pl.num_programs(1) - 1)
    def _():
        o_ref[...] = z.reshape(b_blk, S, D).astype(o_ref.dtype)


def _vmem_limit_bytes(N, D, F, H, b_blk):
    f32, bf = 4, 2
    S = N // b_blk
    G = b_blk * H
    dh = D // H
    # bf16 weights + f32 biases/LN params, x2 for double-buffered layer streaming
    w = ((3 * D * D + D * D + 2 * D * F) * bf + (3 * D + 6 * D + F) * f32) * 2
    # activations / intermediates
    a = (4 * N * D + N * 3 * D + 3 * G * S * dh + 2 * G * S * S + N * F) * f32
    est = 2 * (w + a)                                    # headroom
    # cap at 48 MiB: below v7x's 64 MiB physical VMEM, fine on v5e/v6e.
    return int(min(max(est, 32 * 1024 * 1024), 48 * 1024 * 1024))


def make_encoder_call(B, S, D, F, nhead, n_layers, b_blk):
    assert B % b_blk == 0
    nb = B // b_blk
    N = b_blk * S

    def wspec(shape):
        # per-layer weight block, streamed along the layer grid axis
        return pl.BlockSpec((1,) + shape, lambda b, l: (l,) + (0,) * len(shape))

    in_specs = [
        pl.BlockSpec((b_blk, S, D), lambda b, l: (b, 0, 0)),   # src
        pl.BlockSpec((S, D), lambda b, l: (0, 0)),             # positional encoding
        wspec((D, 3 * D)), wspec((1, 3 * D)),                  # Wqkv, bqkv
        wspec((D, D)), wspec((1, D)),                          # Wo, bo
        wspec((D, F)), wspec((1, F)),                          # W1, b1
        wspec((F, D)), wspec((1, D)),                          # W2, b2
        wspec((1, D)), wspec((1, D)),                          # gamma1, beta1
        wspec((1, D)), wspec((1, D)),                          # gamma2, beta2
    ]
    kernel = functools.partial(_encoder_stack_kernel,
                               nhead=nhead, b_blk=b_blk, S=S, D=D)
    return pl.pallas_call(
        kernel,
        out_shape=jax.ShapeDtypeStruct((B, S, D), jnp.float32),
        grid=(nb, n_layers),
        in_specs=in_specs,
        out_specs=pl.BlockSpec((b_blk, S, D), lambda b, l: (b, 0, 0)),
        scratch_shapes=[pltpu.VMEM((N, D), jnp.float32)],      # activation carry
        compiler_params=pltpu.CompilerParams(
            dimension_semantics=("arbitrary", "arbitrary"),
            vmem_limit_bytes=_vmem_limit_bytes(N, D, F, nhead, b_blk),
        ),
    )


# ---------------------------------------------------------------------------
# Host-side parameter preparation: pack QKV, fold 1/sqrt(dh), stack layers, bf16 cast
# ---------------------------------------------------------------------------
def prepare_stacked_params(layer_params, nhead):
    D, F = layer_params[0]["w1"].shape
    assert D % nhead == 0
    dh = D // nhead
    scale = 1.0 / math.sqrt(dh)
    bf16 = jnp.bfloat16

    wqkv, bqkv, wo, bo, w1, b1, w2, b2 = [], [], [], [], [], [], [], []
    g1, be1, g2, be2 = [], [], [], []
    for p in layer_params:
        wqkv.append(jnp.concatenate([p["wq"] * scale, p["wk"], p["wv"]],
                                    axis=1).astype(bf16))              # (D, 3D)
        bqkv.append(jnp.concatenate([p["bq"] * scale, p["bk"], p["bv"]],
                                    axis=1))                           # (1, 3D)
        wo.append(p["wo"].astype(bf16));  bo.append(p["bo"])
        w1.append(p["w1"].astype(bf16));  b1.append(p["b1"])
        w2.append(p["w2"].astype(bf16));  b2.append(p["b2"])
        g1.append(p["g1"]); be1.append(p["be1"]); g2.append(p["g2"]); be2.append(p["be2"])

    stack = lambda xs: jnp.stack(xs, axis=0)
    return {"wqkv": stack(wqkv), "bqkv": stack(bqkv), "wo": stack(wo), "bo": stack(bo),
            "w1": stack(w1), "b1": stack(b1), "w2": stack(w2), "b2": stack(b2),
            "g1": stack(g1), "be1": stack(be1), "g2": stack(g2), "be2": stack(be2)}


# ---------------------------------------------------------------------------
# Encoder forward (single fused pallas_call)
# ---------------------------------------------------------------------------
def encoder_pallas(src, pe, sp, nhead, src_mask=None):
    if src_mask is not None:
        # TODO(synk): masked attention path not implemented (reference MHA source unavailable).
        raise NotImplementedError("src_mask is not supported")
    B, S, D = src.shape
    L = sp["wqkv"].shape[0]
    F = sp["w1"].shape[2]
    b_blk = B          # whole batch per grid step (max matmul M at these shapes)
    call = make_encoder_call(B, S, D, F, nhead, L, b_blk)
    return call(src, pe,
                sp["wqkv"], sp["bqkv"], sp["wo"], sp["bo"],
                sp["w1"], sp["b1"], sp["w2"], sp["b2"],
                sp["g1"], sp["be1"], sp["g2"], sp["be2"])


# ---------------------------------------------------------------------------
# Pure-JAX reference mirroring the kernel numerics (bf16 weights/activation casts)
# ---------------------------------------------------------------------------
def reference_forward(src, pe, sp, nhead):
    bf16 = jnp.bfloat16
    B, S, D = src.shape
    L = sp["wqkv"].shape[0]
    dh = D // nhead
    eps = 1e-5
    x = (src + pe[None]).reshape(B * S, D)
    for l in range(L):
        qkv = jnp.dot(x.astype(bf16), sp["wqkv"][l],
                      preferred_element_type=jnp.float32) + sp["bqkv"][l]
        q, k, v = qkv[:, :D], qkv[:, D:2 * D], qkv[:, 2 * D:]

        def heads(t):
            return (t.reshape(B, S, nhead, dh).transpose(0, 2, 1, 3)
                     .reshape(B * nhead, S, dh).astype(bf16))

        qh, kh, vh = heads(q), heads(k), heads(v)
        s = jnp.einsum("gqe,gke->gqk", qh, kh, preferred_element_type=jnp.float32)
        s = s - jnp.max(s, axis=-1, keepdims=True)
        p = jnp.exp(s)
        p = p / jnp.sum(p, axis=-1, keepdims=True)
        ctx = jnp.einsum("gqk,gke->gqe", p.astype(bf16), vh,
                         preferred_element_type=jnp.float32)
        ctx = (ctx.reshape(B, nhead, S, dh).transpose(0, 2, 1, 3)
                  .reshape(B * S, D))
        src2 = jnp.dot(ctx.astype(bf16), sp["wo"][l],
                       preferred_element_type=jnp.float32) + sp["bo"][l]
        y = x + src2
        mu = y.mean(-1, keepdims=True)
        var = ((y - mu) ** 2).mean(-1, keepdims=True)
        y = (y - mu) * lax.rsqrt(var + eps) * sp["g1"][l] + sp["be1"][l]
        h1 = jnp.maximum(jnp.dot(y.astype(bf16), sp["w1"][l],
                                 preferred_element_type=jnp.float32) + sp["b1"][l], 0.0)
        h2 = jnp.dot(h1.astype(bf16), sp["w2"][l],
                     preferred_element_type=jnp.float32) + sp["b2"][l]
        z = y + h2
        mu2 = z.mean(-1, keepdims=True)
        var2 = ((z - mu2) ** 2).mean(-1, keepdims=True)
        x = (z - mu2) * lax.rsqrt(var2 + eps) * sp["g2"][l] + sp["be2"][l]
    return x.reshape(B, S, D)


# ---------------------------------------------------------------------------
# Parameter init + positional-encoding table (deterministic, in-script)
# ---------------------------------------------------------------------------
def init_layer_params(key, D, F):
    ks = jax.random.split(key, 6)
    s_d = 1.0 / math.sqrt(D)
    s_f = 1.0 / math.sqrt(F)
    return {
        "wq": jax.random.normal(ks[0], (D, D), jnp.float32) * s_d,
        "wk": jax.random.normal(ks[1], (D, D), jnp.float32) * s_d,
        "wv": jax.random.normal(ks[2], (D, D), jnp.float32) * s_d,
        "wo": jax.random.normal(ks[3], (D, D), jnp.float32) * s_d,
        "w1": jax.random.normal(ks[4], (D, F), jnp.float32) * s_d,
        "w2": jax.random.normal(ks[5], (F, D), jnp.float32) * s_f,
        "bq": jnp.zeros((1, D), jnp.float32), "bk": jnp.zeros((1, D), jnp.float32),
        "bv": jnp.zeros((1, D), jnp.float32), "bo": jnp.zeros((1, D), jnp.float32),
        "b1": jnp.zeros((1, F), jnp.float32), "b2": jnp.zeros((1, D), jnp.float32),
        "g1": jnp.ones((1, D), jnp.float32), "be1": jnp.zeros((1, D), jnp.float32),
        "g2": jnp.ones((1, D), jnp.float32), "be2": jnp.zeros((1, D), jnp.float32),
    }


def sinusoidal_pe(max_len, D):
    pos = jnp.arange(max_len, dtype=jnp.float32)[:, None]
    i = jnp.arange(0, D, 2, dtype=jnp.float32)[None, :]
    div = jnp.exp(-i * (math.log(10000.0) / D))
    angles = pos * div
    pe = jnp.zeros((max_len, D), jnp.float32)
    pe = pe.at[:, 0::2].set(jnp.sin(angles))
    pe = pe.at[:, 1::2].set(jnp.cos(angles))
    return pe


if __name__ == "__main__":
    # Small, module-consistent shapes; d_model / dim_feedforward lane-dense (x128).
    B, S = 2, 8
    d_model, dim_feedforward, nhead, n_layers, max_len = 128, 256, 4, 2, 16

    key = jax.random.PRNGKey(0)
    k_in, *k_layers = jax.random.split(key, 1 + n_layers)

    src = jax.random.normal(k_in, (B, S, d_model), jnp.float32)
    params = [init_layer_params(k, d_model, dim_feedforward) for k in k_layers]
    pe = sinusoidal_pe(max_len, d_model)[:S]

    sp = prepare_stacked_params(params, nhead)

    out = encoder_pallas(src, pe, sp, nhead, src_mask=None)
    out = jax.block_until_ready(out)

    assert out.shape == (B, S, d_model)
    assert bool(jnp.all(jnp.isfinite(out)))

    ref = reference_forward(src, pe, sp, nhead)
    assert bool(jnp.allclose(out, ref, rtol=2e-2, atol=2e-2)), \
        "kernel output does not match JAX reference"

    print("KERNEL_OK")
</pallas_src>

<mosaic_0001>
module attributes {stable_mosaic.version = 11 : i64} {
  func.func @_encoder_stack_kernel(%arg0: i32, %arg1: i32, %arg2: memref<2x8x128xf32, #tpu.memory_space<vmem>>, %arg3: memref<8x128xf32, #tpu.memory_space<vmem>>, %arg4: memref<1x128x384xbf16, #tpu.memory_space<vmem>>, %arg5: memref<1x1x384xf32, #tpu.memory_space<vmem>>, %arg6: memref<1x128x128xbf16, #tpu.memory_space<vmem>>, %arg7: memref<1x1x128xf32, #tpu.memory_space<vmem>>, %arg8: memref<1x128x256xbf16, #tpu.memory_space<vmem>>, %arg9: memref<1x1x256xf32, #tpu.memory_space<vmem>>, %arg10: memref<1x256x128xbf16, #tpu.memory_space<vmem>>, %arg11: memref<1x1x128xf32, #tpu.memory_space<vmem>>, %arg12: memref<1x1x128xf32, #tpu.memory_space<vmem>>, %arg13: memref<1x1x128xf32, #tpu.memory_space<vmem>>, %arg14: memref<1x1x128xf32, #tpu.memory_space<vmem>>, %arg15: memref<1x1x128xf32, #tpu.memory_space<vmem>>, %arg16: memref<2x8x128xf32, #tpu.memory_space<vmem>>, %arg17: memref<16x128xf32, #tpu.memory_space<vmem>>) attributes {dimension_semantics = [#tpu.dimension_semantics<arbitrary>, #tpu.dimension_semantics<arbitrary>], iteration_bounds = array<i64: 1, 2>, scalar_prefetch = 0 : i64, scratch_operands = 1 : i64, tpu.core_type = #tpu.core_type<tc>, window_params = [{transform_indices = @transform_0, window_bounds = array<i64: 2, 8, 128>}, {pipeline_mode = #tpu.pipeline_mode<synchronous>, transform_indices = @transform_1, window_bounds = array<i64: 8, 128>}, {transform_indices = @transform_2, window_bounds = array<i64: 1, 128, 384>}, {transform_indices = @transform_3, window_bounds = array<i64: 1, 1, 384>}, {transform_indices = @transform_4, window_bounds = array<i64: 1, 128, 128>}, {transform_indices = @transform_5, window_bounds = array<i64: 1, 1, 128>}, {transform_indices = @transform_6, window_bounds = array<i64: 1, 128, 256>}, {transform_indices = @transform_7, window_bounds = array<i64: 1, 1, 256>}, {transform_indices = @transform_8, window_bounds = array<i64: 1, 256, 128>}, {transform_indices = @transform_9, window_bounds = array<i64: 1, 1, 128>}, {transform_indices = @transform_10, window_bounds = array<i64: 1, 1, 128>}, {transform_indices = @transform_11, window_bounds = array<i64: 1, 1, 128>}, {transform_indices = @transform_12, window_bounds = array<i64: 1, 1, 128>}, {transform_indices = @transform_13, window_bounds = array<i64: 1, 1, 128>}, {transform_indices = @transform_14, window_bounds = array<i64: 2, 8, 128>}]} {
    %c0_i32 = arith.constant 0 : i32
    %0 = arith.cmpi eq, %arg1, %c0_i32 : i32
    %1 = arith.extui %0 : i1 to i32
    %c0_i32_0 = arith.constant 0 : i32
    %2 = arith.cmpi ne, %1, %c0_i32_0 : i32
    scf.if %2 {
      %c0_59 = arith.constant 0 : index
      %c0_60 = arith.constant 0 : index
      %c0_61 = arith.constant 0 : index
      %188 = vector.load %arg2[%c0_59, %c0_60, %c0_61] : memref<2x8x128xf32, #tpu.memory_space<vmem>>, vector<2x8x128xf32>
      %c0_62 = arith.constant 0 : index
      %c0_63 = arith.constant 0 : index
      %189 = vector.load %arg3[%c0_62, %c0_63] : memref<8x128xf32, #tpu.memory_space<vmem>>, vector<8x128xf32>
      %190 = vector.shape_cast %189 : vector<8x128xf32> to vector<1x8x128xf32>
      %191 = vector.broadcast %190 : vector<1x8x128xf32> to vector<2x8x128xf32>
      %192 = arith.addf %188, %191 : vector<2x8x128xf32>
      %193 = vector.shape_cast %192 : vector<2x8x128xf32> to vector<16x128xf32>
      %c0_64 = arith.constant 0 : index
      %c0_65 = arith.constant 0 : index
      %194 = vector.load %arg17[%c0_64, %c0_65] : memref<16x128xf32, #tpu.memory_space<vmem>>, vector<16x128xf32>
      tpu.vector_store %arg17[%c0_64, %c0_65], %193 {strides = array<i32>} : memref<16x128xf32, #tpu.memory_space<vmem>>, vector<16x128xf32>,
    } else {
    }
    %c0 = arith.constant 0 : index
    %c0_1 = arith.constant 0 : index
    %3 = vector.load %arg17[%c0, %c0_1] : memref<16x128xf32, #tpu.memory_space<vmem>>, vector<16x128xf32>
    %4 = arith.truncf %3 : vector<16x128xf32> to vector<16x128xbf16>
    %c0_2 = arith.constant 0 : index
    %c0_3 = arith.constant 0 : index
    %c0_4 = arith.constant 0 : index
    %5 = vector.load %arg4[%c0_2, %c0_3, %c0_4] : memref<1x128x384xbf16, #tpu.memory_space<vmem>>, vector<1x128x384xbf16>
    %6 = vector.shape_cast %5 : vector<1x128x384xbf16> to vector<128x384xbf16>
    %cst = arith.constant dense<0.000000e+00> : vector<16x384xf32>
    %7 = tpu.matmul %4, %6, %cst {dimension_numbers = #tpu.dot_dimension_numbers<[1], [0], [0], [1], [0, 0, 1, 1], [], []>} : vector<16x128xbf16>, vector<128x384xbf16>, vector<16x384xf32> -> vector<16x384xf32>
    %c0_5 = arith.constant 0 : index
    %c0_6 = arith.constant 0 : index
    %c0_7 = arith.constant 0 : index
    %8 = vector.load %arg5[%c0_5, %c0_6, %c0_7] : memref<1x1x384xf32, #tpu.memory_space<vmem>>, vector<1x1x384xf32>
    %9 = vector.shape_cast %8 : vector<1x1x384xf32> to vector<1x384xf32>
    %10 = vector.broadcast %9 : vector<1x384xf32> to vector<16x384xf32>
    %11 = arith.addf %7, %10 : vector<16x384xf32>
    %12 = vector.extract_strided_slice %11 {offsets = [0, 0], sizes = [8, 384], strides = [1, 1]} : vector<16x384xf32> to vector<8x384xf32>
    %13 = vector.extract_strided_slice %12 {offsets = [0, 0], sizes = [8, 32], strides = [1, 1]} : vector<8x384xf32> to vector<8x32xf32>
    %14 = vector.extract_strided_slice %12 {offsets = [0, 32], sizes = [8, 32], strides = [1, 1]} : vector<8x384xf32> to vector<8x32xf32>
    %15 = vector.extract_strided_slice %12 {offsets = [0, 64], sizes = [8, 32], strides = [1, 1]} : vector<8x384xf32> to vector<8x32xf32>
    %16 = vector.extract_strided_slice %12 {offsets = [0, 96], sizes = [8, 32], strides = [1, 1]} : vector<8x384xf32> to vector<8x32xf32>
    %17 = vector.extract_strided_slice %11 {offsets = [8, 0], sizes = [8, 384], strides = [1, 1]} : vector<16x384xf32> to vector<8x384xf32>
    %18 = vector.extract_strided_slice %17 {offsets = [0, 0], sizes = [8, 32], strides = [1, 1]} : vector<8x384xf32> to vector<8x32xf32>
    %19 = vector.extract_strided_slice %17 {offsets = [0, 32], sizes = [8, 32], strides = [1, 1]} : vector<8x384xf32> to vector<8x32xf32>
    %20 = vector.extract_strided_slice %17 {offsets = [0, 64], sizes = [8, 32], strides = [1, 1]} : vector<8x384xf32> to vector<8x32xf32>
    %21 = vector.extract_strided_slice %17 {offsets = [0, 96], sizes = [8, 32], strides = [1, 1]} : vector<8x384xf32> to vector<8x32xf32>
    %22 = vector.shape_cast %13 : vector<8x32xf32> to vector<1x8x32xf32>
    %23 = vector.shape_cast %14 : vector<8x32xf32> to vector<1x8x32xf32>
    %24 = vector.shape_cast %15 : vector<8x32xf32> to vector<1x8x32xf32>
    %25 = vector.shape_cast %16 : vector<8x32xf32> to vector<1x8x32xf32>
    %26 = vector.shape_cast %18 : vector<8x32xf32> to vector<1x8x32xf32>
    %27 = vector.shape_cast %19 : vector<8x32xf32> to vector<1x8x32xf32>
    %28 = vector.shape_cast %20 : vector<8x32xf32> to vector<1x8x32xf32>
    %29 = vector.shape_cast %21 : vector<8x32xf32> to vector<1x8x32xf32>
    %30 = tpu.concatenate %22, %23, %24, %25, %26, %27, %28, %29 in 0 : vector<1x8x32xf32>, vector<1x8x32xf32>, vector<1x8x32xf32>, vector<1x8x32xf32>, vector<1x8x32xf32>, vector<1x8x32xf32>, vector<1x8x32xf32>, vector<1x8x32xf32> -> vector<8x8x32xf32>
    %31 = arith.truncf %30 : vector<8x8x32xf32> to vector<8x8x32xbf16>
    %32 = vector.extract_strided_slice %11 {offsets = [0, 0], sizes = [8, 384], strides = [1, 1]} : vector<16x384xf32> to vector<8x384xf32>
    %33 = vector.extract_strided_slice %32 {offsets = [0, 128], sizes = [8, 32], strides = [1, 1]} : vector<8x384xf32> to vector<8x32xf32>
    %34 = vector.extract_strided_slice %32 {offsets = [0, 160], sizes = [8, 32], strides = [1, 1]} : vector<8x384xf32> to vector<8x32xf32>
    %35 = vector.extract_strided_slice %32 {offsets = [0, 192], sizes = [8, 32], strides = [1, 1]} : vector<8x384xf32> to vector<8x32xf32>
    %36 = vector.extract_strided_slice %32 {offsets = [0, 224], sizes = [8, 32], strides = [1, 1]} : vector<8x384xf32> to vector<8x32xf32>
    %37 = vector.extract_strided_slice %11 {offsets = [8, 0], sizes = [8, 384], strides = [1, 1]} : vector<16x384xf32> to vector<8x384xf32>
    %38 = vector.extract_strided_slice %37 {offsets = [0, 128], sizes = [8, 32], strides = [1, 1]} : vector<8x384xf32> to vector<8x32xf32>
    %39 = vector.extract_strided_slice %37 {offsets = [0, 160], sizes = [8, 32], strides = [1, 1]} : vector<8x384xf32> to vector<8x32xf32>
    %40 = vector.extract_strided_slice %37 {offsets = [0, 192], sizes = [8, 32], strides = [1, 1]} : vector<8x384xf32> to vector<8x32xf32>
    %41 = vector.extract_strided_slice %37 {offsets = [0, 224], sizes = [8, 32], strides = [1, 1]} : vector<8x384xf32> to vector<8x32xf32>
    %42 = vector.shape_cast %33 : vector<8x32xf32> to vector<1x8x32xf32>
    %43 = vector.shape_cast %34 : vector<8x32xf32> to vector<1x8x32xf32>
    %44 = vector.shape_cast %35 : vector<8x32xf32> to vector<1x8x32xf32>
    %45 = vector.shape_cast %36 : vector<8x32xf32> to vector<1x8x32xf32>
    %46 = vector.shape_cast %38 : vector<8x32xf32> to vector<1x8x32xf32>
    %47 = vector.shape_cast %39 : vector<8x32xf32> to vector<1x8x32xf32>
    %48 = vector.shape_cast %40 : vector<8x32xf32> to vector<1x8x32xf32>
    %49 = vector.shape_cast %41 : vector<8x32xf32> to vector<1x8x32xf32>
    %50 = tpu.concatenate %42, %43, %44, %45, %46, %47, %48, %49 in 0 : vector<1x8x32xf32>, vector<1x8x32xf32>, vector<1x8x32xf32>, vector<1x8x32xf32>, vector<1x8x32xf32>, vector<1x8x32xf32>, vector<1x8x32xf32>, vector<1x8x32xf32> -> vector<8x8x32xf32>
    %51 = arith.truncf %50 : vector<8x8x32xf32> to vector<8x8x32xbf16>
    %52 = vector.extract_strided_slice %11 {offsets = [0, 0], sizes = [8, 384], strides = [1, 1]} : vector<16x384xf32> to vector<8x384xf32>
    %53 = vector.extract_strided_slice %52 {offsets = [0, 256], sizes = [8, 32], strides = [1, 1]} : vector<8x384xf32> to vector<8x32xf32>
    %54 = vector.extract_strided_slice %52 {offsets = [0, 288], sizes = [8, 32], strides = [1, 1]} : vector<8x384xf32> to vector<8x32xf32>
    %55 = vector.extract_strided_slice %52 {offsets = [0, 320], sizes = [8, 32], strides = [1, 1]} : vector<8x384xf32> to vector<8x32xf32>
    %56 = vector.extract_strided_slice %52 {offsets = [0, 352], sizes = [8, 32], strides = [1, 1]} : vector<8x384xf32> to vector<8x32xf32>
    %57 = vector.extract_strided_slice %11 {offsets = [8, 0], sizes = [8, 384], strides = [1, 1]} : vector<16x384xf32> to vector<8x384xf32>
    %58 = vector.extract_strided_slice %57 {offsets = [0, 256], sizes = [8, 32], strides = [1, 1]} : vector<8x384xf32> to vector<8x32xf32>
    %59 = vector.extract_strided_slice %57 {offsets = [0, 288], sizes = [8, 32], strides = [1, 1]} : vector<8x384xf32> to vector<8x32xf32>
    %60 = vector.extract_strided_slice %57 {offsets = [0, 320], sizes = [8, 32], strides = [1, 1]} : vector<8x384xf32> to vector<8x32xf32>
    %61 = vector.extract_strided_slice %57 {offsets = [0, 352], sizes = [8, 32], strides = [1, 1]} : vector<8x384xf32> to vector<8x32xf32>
    %62 = vector.shape_cast %53 : vector<8x32xf32> to vector<1x8x32xf32>
    %63 = vector.shape_cast %54 : vector<8x32xf32> to vector<1x8x32xf32>
    %64 = vector.shape_cast %55 : vector<8x32xf32> to vector<1x8x32xf32>
    %65 = vector.shape_cast %56 : vector<8x32xf32> to vector<1x8x32xf32>
    %66 = vector.shape_cast %58 : vector<8x32xf32> to vector<1x8x32xf32>
    %67 = vector.shape_cast %59 : vector<8x32xf32> to vector<1x8x32xf32>
    %68 = vector.shape_cast %60 : vector<8x32xf32> to vector<1x8x32xf32>
    %69 = vector.shape_cast %61 : vector<8x32xf32> to vector<1x8x32xf32>
    %70 = tpu.concatenate %62, %63, %64, %65, %66, %67, %68, %69 in 0 : vector<1x8x32xf32>, vector<1x8x32xf32>, vector<1x8x32xf32>, vector<1x8x32xf32>, vector<1x8x32xf32>, vector<1x8x32xf32>, vector<1x8x32xf32>, vector<1x8x32xf32> -> vector<8x8x32xf32>
    %71 = arith.truncf %70 : vector<8x8x32xf32> to vector<8x8x32xbf16>
    "tpu.trace_start"() <{level = 10 : i32, message = "gqe,gke->gqk"}> : () -> ()
    %cst_8 = arith.constant dense<0.000000e+00> : vector<8x8x8xf32>
    %72 = tpu.matmul %31, %51, %cst_8 {dimension_numbers = #tpu.dot_dimension_numbers<[2], [2], [1], [1], [0, 0, 0, 1, 1, 1], [0], [0]>} : vector<8x8x32xbf16>, vector<8x8x32xbf16>, vector<8x8x8xf32> -> vector<8x8x8xf32>
    "tpu.trace_stop"() : () -> ()
    %cst_9 = arith.constant dense<0xFF800000> : vector<8x8xf32>
    %73 = vector.multi_reduction <maximumf>, %72, %cst_9 [2] : vector<8x8x8xf32> to vector<8x8xf32>
    %74 = vector.shape_cast %73 : vector<8x8xf32> to vector<8x8x1xf32>
    %75 = vector.broadcast %74 : vector<8x8x1xf32> to vector<8x8x8xf32>
    %76 = arith.subf %72, %75 : vector<8x8x8xf32>
    %77 = math.exp %76 : vector<8x8x8xf32>
    %cst_10 = arith.constant dense<0.000000e+00> : vector<8x8xf32>
    %78 = vector.multi_reduction <add>, %77, %cst_10 [2] : vector<8x8x8xf32> to vector<8x8xf32>
    %79 = vector.shape_cast %78 : vector<8x8xf32> to vector<8x8x1xf32>
    %80 = tpu.reciprocal %79 {approx = true} : vector<8x8x1xf32> -> vector<8x8x1xf32>
    %81 = vector.broadcast %80 : vector<8x8x1xf32> to vector<8x8x8xf32>
    %82 = arith.mulf %77, %81 : vector<8x8x8xf32>
    %83 = arith.truncf %82 : vector<8x8x8xf32> to vector<8x8x8xbf16>
    "tpu.trace_start"() <{level = 10 : i32, message = "gqk,gke->gqe"}> : () -> ()
    %cst_11 = arith.constant dense<0.000000e+00> : vector<8x8x32xf32>
    %84 = tpu.matmul %83, %71, %cst_11 {dimension_numbers = #tpu.dot_dimension_numbers<[2], [1], [1], [2], [0, 0, 0, 1, 1, 2], [0], [0]>} : vector<8x8x8xbf16>, vector<8x8x32xbf16>, vector<8x8x32xf32> -> vector<8x8x32xf32>
    "tpu.trace_stop"() : () -> ()
    %85 = vector.extract_strided_slice %84 {offsets = [0, 0, 0], sizes = [1, 8, 32], strides = [1, 1, 1]} : vector<8x8x32xf32> to vector<1x8x32xf32>
    %86 = vector.shape_cast %85 : vector<1x8x32xf32> to vector<8x32xf32>
    %87 = vector.extract_strided_slice %84 {offsets = [1, 0, 0], sizes = [1, 8, 32], strides = [1, 1, 1]} : vector<8x8x32xf32> to vector<1x8x32xf32>
    %88 = vector.shape_cast %87 : vector<1x8x32xf32> to vector<8x32xf32>
    %89 = vector.extract_strided_slice %84 {offsets = [2, 0, 0], sizes = [1, 8, 32], strides = [1, 1, 1]} : vector<8x8x32xf32> to vector<1x8x32xf32>
    %90 = vector.shape_cast %89 : vector<1x8x32xf32> to vector<8x32xf32>
    %91 = vector.extract_strided_slice %84 {offsets = [3, 0, 0], sizes = [1, 8, 32], strides = [1, 1, 1]} : vector<8x8x32xf32> to vector<1x8x32xf32>
    %92 = vector.shape_cast %91 : vector<1x8x32xf32> to vector<8x32xf32>
    %93 = tpu.concatenate %86, %88, %90, %92 in 1 : vector<8x32xf32>, vector<8x32xf32>, vector<8x32xf32>, vector<8x32xf32> -> vector<8x128xf32>
    %94 = vector.extract_strided_slice %84 {offsets = [4, 0, 0], sizes = [1, 8, 32], strides = [1, 1, 1]} : vector<8x8x32xf32> to vector<1x8x32xf32>
    %95 = vector.shape_cast %94 : vector<1x8x32xf32> to vector<8x32xf32>
    %96 = vector.extract_strided_slice %84 {offsets = [5, 0, 0], sizes = [1, 8, 32], strides = [1, 1, 1]} : vector<8x8x32xf32> to vector<1x8x32xf32>
    %97 = vector.shape_cast %96 : vector<1x8x32xf32> to vector<8x32xf32>
    %98 = vector.extract_strided_slice %84 {offsets = [6, 0, 0], sizes = [1, 8, 32], strides = [1, 1, 1]} : vector<8x8x32xf32> to vector<1x8x32xf32>
    %99 = vector.shape_cast %98 : vector<1x8x32xf32> to vector<8x32xf32>
    %100 = vector.extract_strided_slice %84 {offsets = [7, 0, 0], sizes = [1, 8, 32], strides = [1, 1, 1]} : vector<8x8x32xf32> to vector<1x8x32xf32>
    %101 = vector.shape_cast %100 : vector<1x8x32xf32> to vector<8x32xf32>
    %102 = tpu.concatenate %95, %97, %99, %101 in 1 : vector<8x32xf32>, vector<8x32xf32>, vector<8x32xf32>, vector<8x32xf32> -> vector<8x128xf32>
    %103 = tpu.concatenate %93, %102 in 0 : vector<8x128xf32>, vector<8x128xf32> -> vector<16x128xf32>
    %104 = arith.truncf %103 : vector<16x128xf32> to vector<16x128xbf16>
    %c0_12 = arith.constant 0 : index
    %c0_13 = arith.constant 0 : index
    %c0_14 = arith.constant 0 : index
    %105 = vector.load %arg6[%c0_12, %c0_13, %c0_14] : memref<1x128x128xbf16, #tpu.memory_space<vmem>>, vector<1x128x128xbf16>
    %106 = vector.shape_cast %105 : vector<1x128x128xbf16> to vector<128x128xbf16>
    %cst_15 = arith.constant dense<0.000000e+00> : vector<16x128xf32>
    %107 = tpu.matmul %104, %106, %cst_15 {dimension_numbers = #tpu.dot_dimension_numbers<[1], [0], [0], [1], [0, 0, 1, 1], [], []>} : vector<16x128xbf16>, vector<128x128xbf16>, vector<16x128xf32> -> vector<16x128xf32>
    %c0_16 = arith.constant 0 : index
    %c0_17 = arith.constant 0 : index
    %c0_18 = arith.constant 0 : index
    %108 = vector.load %arg7[%c0_16, %c0_17, %c0_18] : memref<1x1x128xf32, #tpu.memory_space<vmem>>, vector<1x1x128xf32>
    %109 = vector.shape_cast %108 : vector<1x1x128xf32> to vector<1x128xf32>
    %110 = vector.broadcast %109 : vector<1x128xf32> to vector<16x128xf32>
    %111 = arith.addf %107, %110 : vector<16x128xf32>
    %112 = arith.addf %3, %111 : vector<16x128xf32>
    %cst_19 = arith.constant dense<0.000000e+00> : vector<16xf32>
    %113 = vector.multi_reduction <add>, %112, %cst_19 [1] : vector<16x128xf32> to vector<16xf32>
    %114 = vector.shape_cast %113 : vector<16xf32> to vector<16x1xf32>
    %cst_20 = arith.constant 1.280000e+02 : f32
    %115 = vector.broadcast %cst_20 : f32 to vector<16x1xf32>
    %116 = arith.divf %114, %115 : vector<16x1xf32>
    %117 = vector.broadcast %116 : vector<16x1xf32> to vector<16x128xf32>
    %118 = arith.subf %112, %117 : vector<16x128xf32>
    %119 = arith.mulf %118, %118 : vector<16x128xf32>
    %cst_21 = arith.constant dense<0.000000e+00> : vector<16xf32>
    %120 = vector.multi_reduction <add>, %119, %cst_21 [1] : vector<16x128xf32> to vector<16xf32>
    %121 = vector.shape_cast %120 : vector<16xf32> to vector<16x1xf32>
    %cst_22 = arith.constant 1.280000e+02 : f32
    %122 = vector.broadcast %cst_22 : f32 to vector<16x1xf32>
    %123 = arith.divf %121, %122 : vector<16x1xf32>
    %124 = vector.broadcast %116 : vector<16x1xf32> to vector<16x128xf32>
    %125 = arith.subf %112, %124 : vector<16x128xf32>
    %cst_23 = arith.constant 9.99999974E-6 : f32
    %126 = vector.broadcast %cst_23 : f32 to vector<16x1xf32>
    %127 = arith.addf %123, %126 : vector<16x1xf32>
    %128 = math.rsqrt %127 : vector<16x1xf32>
    %129 = vector.broadcast %128 : vector<16x1xf32> to vector<16x128xf32>
    %130 = arith.mulf %125, %129 : vector<16x128xf32>
    %c0_24 = arith.constant 0 : index
    %c0_25 = arith.constant 0 : index
    %c0_26 = arith.constant 0 : index
    %131 = vector.load %arg12[%c0_24, %c0_25, %c0_26] : memref<1x1x128xf32, #tpu.memory_space<vmem>>, vector<1x1x128xf32>
    %132 = vector.shape_cast %131 : vector<1x1x128xf32> to vector<1x128xf32>
    %133 = vector.broadcast %132 : vector<1x128xf32> to vector<16x128xf32>
    %134 = arith.mulf %130, %133 : vector<16x128xf32>
    %c0_27 = arith.constant 0 : index
    %c0_28 = arith.constant 0 : index
    %c0_29 = arith.constant 0 : index
    %135 = vector.load %arg13[%c0_27, %c0_28, %c0_29] : memref<1x1x128xf32, #tpu.memory_space<vmem>>, vector<1x1x128xf32>
    %136 = vector.shape_cast %135 : vector<1x1x128xf32> to vector<1x128xf32>
    %137 = vector.broadcast %136 : vector<1x128xf32> to vector<16x128xf32>
    %138 = arith.addf %134, %137 : vector<16x128xf32>
    %139 = arith.truncf %138 : vector<16x128xf32> to vector<16x128xbf16>
    %c0_30 = arith.constant 0 : index
    %c0_31 = arith.constant 0 : index
    %c0_32 = arith.constant 0 : index
    %140 = vector.load %arg8[%c0_30, %c0_31, %c0_32] : memref<1x128x256xbf16, #tpu.memory_space<vmem>>, vector<1x128x256xbf16>
    %141 = vector.shape_cast %140 : vector<1x128x256xbf16> to vector<128x256xbf16>
    %cst_33 = arith.constant dense<0.000000e+00> : vector<16x256xf32>
    %142 = tpu.matmul %139, %141, %cst_33 {dimension_numbers = #tpu.dot_dimension_numbers<[1], [0], [0], [1], [0, 0, 1, 1], [], []>} : vector<16x128xbf16>, vector<128x256xbf16>, vector<16x256xf32> -> vector<16x256xf32>
    %c0_34 = arith.constant 0 : index
    %c0_35 = arith.constant 0 : index
    %c0_36 = arith.constant 0 : index
    %143 = vector.load %arg9[%c0_34, %c0_35, %c0_36] : memref<1x1x256xf32, #tpu.memory_space<vmem>>, vector<1x1x256xf32>
    %144 = vector.shape_cast %143 : vector<1x1x256xf32> to vector<1x256xf32>
    %145 = vector.broadcast %144 : vector<1x256xf32> to vector<16x256xf32>
    %146 = arith.addf %142, %145 : vector<16x256xf32>
    %cst_37 = arith.constant 0.000000e+00 : f32
    %147 = vector.broadcast %cst_37 : f32 to vector<16x256xf32>
    %148 = arith.maximumf %146, %147 : vector<16x256xf32>
    %149 = arith.truncf %148 : vector<16x256xf32> to vector<16x256xbf16>
    %c0_38 = arith.constant 0 : index
    %c0_39 = arith.constant 0 : index
    %c0_40 = arith.constant 0 : index
    %150 = vector.load %arg10[%c0_38, %c0_39, %c0_40] : memref<1x256x128xbf16, #tpu.memory_space<vmem>>, vector<1x256x128xbf16>
    %151 = vector.shape_cast %150 : vector<1x256x128xbf16> to vector<256x128xbf16>
    %cst_41 = arith.constant dense<0.000000e+00> : vector<16x128xf32>
    %152 = tpu.matmul %149, %151, %cst_41 {dimension_numbers = #tpu.dot_dimension_numbers<[1], [0], [0], [1], [0, 0, 1, 1], [], []>} : vector<16x256xbf16>, vector<256x128xbf16>, vector<16x128xf32> -> vector<16x128xf32>
    %c0_42 = arith.constant 0 : index
    %c0_43 = arith.constant 0 : index
    %c0_44 = arith.constant 0 : index
    %153 = vector.load %arg11[%c0_42, %c0_43, %c0_44] : memref<1x1x128xf32, #tpu.memory_space<vmem>>, vector<1x1x128xf32>
    %154 = vector.shape_cast %153 : vector<1x1x128xf32> to vector<1x128xf32>
    %155 = vector.broadcast %154 : vector<1x128xf32> to vector<16x128xf32>
    %156 = arith.addf %152, %155 : vector<16x128xf32>
    %157 = arith.addf %138, %156 : vector<16x128xf32>
    %cst_45 = arith.constant dense<0.000000e+00> : vector<16xf32>
    %158 = vector.multi_reduction <add>, %157, %cst_45 [1] : vector<16x128xf32> to vector<16xf32>
    %159 = vector.shape_cast %158 : vector<16xf32> to vector<16x1xf32>
    %cst_46 = arith.constant 1.280000e+02 : f32
    %160 = vector.broadcast %cst_46 : f32 to vector<16x1xf32>
    %161 = arith.divf %159, %160 : vector<16x1xf32>
    %162 = vector.broadcast %161 : vector<16x1xf32> to vector<16x128xf32>
    %163 = arith.subf %157, %162 : vector<16x128xf32>
    %164 = arith.mulf %163, %163 : vector<16x128xf32>
    %cst_47 = arith.constant dense<0.000000e+00> : vector<16xf32>
    %165 = vector.multi_reduction <add>, %164, %cst_47 [1] : vector<16x128xf32> to vector<16xf32>
    %166 = vector.shape_cast %165 : vector<16xf32> to vector<16x1xf32>
    %cst_48 = arith.constant 1.280000e+02 : f32
    %167 = vector.broadcast %cst_48 : f32 to vector<16x1xf32>
    %168 = arith.divf %166, %167 : vector<16x1xf32>
    %169 = vector.broadcast %161 : vector<16x1xf32> to vector<16x128xf32>
    %170 = arith.subf %157, %169 : vector<16x128xf32>
    %cst_49 = arith.constant 9.99999974E-6 : f32
    %171 = vector.broadcast %cst_49 : f32 to vector<16x1xf32>
    %172 = arith.addf %168, %171 : vector<16x1xf32>
    %173 = math.rsqrt %172 : vector<16x1xf32>
    %174 = vector.broadcast %173 : vector<16x1xf32> to vector<16x128xf32>
    %175 = arith.mulf %170, %174 : vector<16x128xf32>
    %c0_50 = arith.constant 0 : index
    %c0_51 = arith.constant 0 : index
    %c0_52 = arith.constant 0 : index
    %176 = vector.load %arg14[%c0_50, %c0_51, %c0_52] : memref<1x1x128xf32, #tpu.memory_space<vmem>>, vector<1x1x128xf32>
    %177 = vector.shape_cast %176 : vector<1x1x128xf32> to vector<1x128xf32>
    %178 = vector.broadcast %177 : vector<1x128xf32> to vector<16x128xf32>
    %179 = arith.mulf %175, %178 : vector<16x128xf32>
    %c0_53 = arith.constant 0 : index
    %c0_54 = arith.constant 0 : index
    %c0_55 = arith.constant 0 : index
    %180 = vector.load %arg15[%c0_53, %c0_54, %c0_55] : memref<1x1x128xf32, #tpu.memory_space<vmem>>, vector<1x1x128xf32>
    %181 = vector.shape_cast %180 : vector<1x1x128xf32> to vector<1x128xf32>
    %182 = vector.broadcast %181 : vector<1x128xf32> to vector<16x128xf32>
    %183 = arith.addf %179, %182 : vector<16x128xf32>
    %c0_56 = arith.constant 0 : index
    %c0_57 = arith.constant 0 : index
    %184 = vector.load %arg17[%c0_56, %c0_57] : memref<16x128xf32, #tpu.memory_space<vmem>>, vector<16x128xf32>
    tpu.vector_store %arg17[%c0_56, %c0_57], %183 {strides = array<i32>} : memref<16x128xf32, #tpu.memory_space<vmem>>, vector<16x128xf32>,
    %c1_i32 = arith.constant 1 : i32
    %185 = arith.cmpi eq, %arg1, %c1_i32 : i32
    %186 = arith.extui %185 : i1 to i32
    %c0_i32_58 = arith.constant 0 : i32
    %187 = arith.cmpi ne, %186, %c0_i32_58 : i32
    scf.if %187 {
      %188 = vector.shape_cast %183 : vector<16x128xf32> to vector<2x8x128xf32>
      %c0_59 = arith.constant 0 : index
      %c0_60 = arith.constant 0 : index
      %c0_61 = arith.constant 0 : index
      %189 = vector.load %arg16[%c0_59, %c0_60, %c0_61] : memref<2x8x128xf32, #tpu.memory_space<vmem>>, vector<2x8x128xf32>
      tpu.vector_store %arg16[%c0_59, %c0_60, %c0_61], %188 {strides = array<i32>} : memref<2x8x128xf32, #tpu.memory_space<vmem>>, vector<2x8x128xf32>,
    } else {
    }
    return
  }
  func.func @transform_0(%arg0: i32, %arg1: i32) -> (i32, i32, i32) {
    %c0_i32 = arith.constant 0 : i32
    %c0_i32_0 = arith.constant 0 : i32
    %c0_i32_1 = arith.constant 0 : i32
    return %arg0, %c0_i32, %c0_i32_0 : i32, i32, i32
  }
  func.func @transform_1(%arg0: i32, %arg1: i32) -> (i32, i32) {
    %c0_i32 = arith.constant 0 : i32
    %c0_i32_0 = arith.constant 0 : i32
    %c0_i32_1 = arith.constant 0 : i32
    return %c0_i32, %c0_i32_0 : i32, i32
  }
  func.func @transform_2(%arg0: i32, %arg1: i32) -> (i32, i32, i32) {
    %c0_i32 = arith.constant 0 : i32
    %c0_i32_0 = arith.constant 0 : i32
    %c0_i32_1 = arith.constant 0 : i32
    return %arg1, %c0_i32, %c0_i32_0 : i32, i32, i32
  }
  func.func @transform_3(%arg0: i32, %arg1: i32) -> (i32, i32, i32) {
    %c0_i32 = arith.constant 0 : i32
    %c0_i32_0 = arith.constant 0 : i32
    %c0_i32_1 = arith.constant 0 : i32
    return %arg1, %c0_i32, %c0_i32_0 : i32, i32, i32
  }
  func.func @transform_4(%arg0: i32, %arg1: i32) -> (i32, i32, i32) {
    %c0_i32 = arith.constant 0 : i32
    %c0_i32_0 = arith.constant 0 : i32
    %c0_i32_1 = arith.constant 0 : i32
    return %arg1, %c0_i32, %c0_i32_0 : i32, i32, i32
  }
  func.func @transform_5(%arg0: i32, %arg1: i32) -> (i32, i32, i32) {
    %c0_i32 = arith.constant 0 : i32
    %c0_i32_0 = arith.constant 0 : i32
    %c0_i32_1 = arith.constant 0 : i32
    return %arg1, %c0_i32, %c0_i32_0 : i32, i32, i32
  }
  func.func @transform_6(%arg0: i32, %arg1: i32) -> (i32, i32, i32) {
    %c0_i32 = arith.constant 0 : i32
    %c0_i32_0 = arith.constant 0 : i32
    %c0_i32_1 = arith.constant 0 : i32
    return %arg1, %c0_i32, %c0_i32_0 : i32, i32, i32
  }
  func.func @transform_7(%arg0: i32, %arg1: i32) -> (i32, i32, i32) {
    %c0_i32 = arith.constant 0 : i32
    %c0_i32_0 = arith.constant 0 : i32
    %c0_i32_1 = arith.constant 0 : i32
    return %arg1, %c0_i32, %c0_i32_0 : i32, i32, i32
  }
  func.func @transform_8(%arg0: i32, %arg1: i32) -> (i32, i32, i32) {
    %c0_i32 = arith.constant 0 : i32
    %c0_i32_0 = arith.constant 0 : i32
    %c0_i32_1 = arith.constant 0 : i32
    return %arg1, %c0_i32, %c0_i32_0 : i32, i32, i32
  }
  func.func @transform_9(%arg0: i32, %arg1: i32) -> (i32, i32, i32) {
    %c0_i32 = arith.constant 0 : i32
    %c0_i32_0 = arith.constant 0 : i32
    %c0_i32_1 = arith.constant 0 : i32
    return %arg1, %c0_i32, %c0_i32_0 : i32, i32, i32
  }
  func.func @transform_10(%arg0: i32, %arg1: i32) -> (i32, i32, i32) {
    %c0_i32 = arith.constant 0 : i32
    %c0_i32_0 = arith.constant 0 : i32
    %c0_i32_1 = arith.constant 0 : i32
    return %arg1, %c0_i32, %c0_i32_0 : i32, i32, i32
  }
  func.func @transform_11(%arg0: i32, %arg1: i32) -> (i32, i32, i32) {
    %c0_i32 = arith.constant 0 : i32
    %c0_i32_0 = arith.constant 0 : i32
    %c0_i32_1 = arith.constant 0 : i32
    return %arg1, %c0_i32, %c0_i32_0 : i32, i32, i32
  }
  func.func @transform_12(%arg0: i32, %arg1: i32) -> (i32, i32, i32) {
    %c0_i32 = arith.constant 0 : i32
    %c0_i32_0 = arith.constant 0 : i32
    %c0_i32_1 = arith.constant 0 : i32
    return %arg1, %c0_i32, %c0_i32_0 : i32, i32, i32
  }
  func.func @transform_13(%arg0: i32, %arg1: i32) -> (i32, i32, i32) {
    %c0_i32 = arith.constant 0 : i32
    %c0_i32_0 = arith.constant 0 : i32
    %c0_i32_1 = arith.constant 0 : i32
    return %arg1, %c0_i32, %c0_i32_0 : i32, i32, i32
  }
  func.func @transform_14(%arg0: i32, %arg1: i32) -> (i32, i32, i32) {
    %c0_i32 = arith.constant 0 : i32
    %c0_i32_0 = arith.constant 0 : i32
    %c0_i32_1 = arith.constant 0 : i32
    return %arg0, %c0_i32, %c0_i32_0 : i32, i32, i32
  }
}

</mosaic_0001>

<llo_original>
// kernel: tpu_custom_call.1
$region0: #{tpu_custom_call.1}
  #allocation0 [shape = 'u32[]', space=smem, size = 0x4, offset = 0x4, fixed_abs, tag = 'smem constant byte address 0x4 - core index']
  #allocation1 [shape = 'u32[144,128]{1,0:T(1,128)}', space=vmem, size = 0x12000, scoped, tag = 'internal scratch']
  #allocation2 [shape = 'f32[16,128]{1,0:T(8,128)}', space=vmem, size = 0x2000, scoped, tag = 'scratch operand']
  %s0 = inlined_call_operand.hbm [shape: f32[2,8,128], index: 0, kind: input, shape index: {}]
  %s1 = inlined_call_operand.hbm [shape: f32[8,128], index: 1, kind: input, shape index: {}]
  %s2 = inlined_call_operand.hbm [shape: bf16[2,128,384], index: 2, kind: input, shape index: {}]
  %s3 = inlined_call_operand.vmem [shape: f32[2,1,384], index: 3, kind: input, shape index: {}]
  %s4 = inlined_call_operand.hbm [shape: bf16[2,128,128], index: 4, kind: input, shape index: {}]
  %s5 = inlined_call_operand.vmem [shape: f32[2,1,128], index: 5, kind: input, shape index: {}]
  %s6 = inlined_call_operand.hbm [shape: bf16[2,128,256], index: 6, kind: input, shape index: {}]
  %s7 = inlined_call_operand.vmem [shape: f32[2,1,256], index: 7, kind: input, shape index: {}]
  %s8 = inlined_call_operand.hbm [shape: bf16[2,256,128], index: 8, kind: input, shape index: {}]
  %s9 = inlined_call_operand.vmem [shape: f32[2,1,128], index: 9, kind: input, shape index: {}]
  %s10 = inlined_call_operand.vmem [shape: f32[2,1,128], index: 10, kind: input, shape index: {}]
  %s11 = inlined_call_operand.vmem [shape: f32[2,1,128], index: 11, kind: input, shape index: {}]
  %s12 = inlined_call_operand.vmem [shape: f32[2,1,128], index: 12, kind: input, shape index: {}]
  %s13 = inlined_call_operand.vmem [shape: f32[2,1,128], index: 13, kind: input, shape index: {}]
  %s14 = inlined_call_operand.hbm [shape: f32[2,8,128], index: 14, kind: output, shape index: {}]
  %s15 = sld [smem:[#allocation0]]
  $region121: #{tpu_custom_call.1} parent=0
    _
  %s17 = ssub.s32 1, %s15
  %s18 = scalar_select 0, %s17, %s15
  $region1: #{tpu_custom_call.1} parent=0
    #allocation3 [shape = 'u8[8192]{0}', space=vmem, size = 0x2000, scoped, tag = 'input window, operand 0, single buffered']
    #allocation4 [shape = 's32[2]{0}', space=sflag, size = 0x8, scoped, tag = 'scoped memory for tpu_custom_call.1']
    #allocation5 [shape = 's32[2]{0}', space=sflag, size = 0x8, scoped, tag = 'scoped memory for tpu_custom_call.1']
    #allocation6 [shape = 'u8[4096]{0}', space=vmem, size = 0x1000, scoped, tag = 'input window, operand 1, single buffered']
    #allocation7 [shape = 's32[1]{0}', space=sflag, size = 0x4, scoped, tag = 'scoped memory for tpu_custom_call.1']
    #allocation8 [shape = 'u8[196608]{0}', space=vmem, size = 0x30000, scoped, tag = 'input window, operand 2']
    #allocation9 [shape = 'u8[65536]{0}', space=vmem, size = 0x10000, scoped, tag = 'input window, operand 4']
    #allocation10 [shape = 'u8[131072]{0}', space=vmem, size = 0x20000, scoped, tag = 'input window, operand 6']
    #allocation11 [shape = 'u8[131072]{0}', space=vmem, size = 0x20000, scoped, tag = 'input window, operand 8']
    #allocation12 [shape = 'u8[8192]{0}', space=vmem, size = 0x2000, scoped, tag = 'output window, operand 0, single buffered']
    %19 = vsyncpa [#allocation4], 0
    %20 = vsyncpa [#allocation7], 0
    %21 = vsyncpa [#allocation5], 0
    loop: start=0, step=1, limit=4
    $region2: #{tpu_custom_call.1} parent=1 // loop_pre_header
      _
    $region3: #{tpu_custom_call.1} parent=1 // loop_header
      %s23 = sphi 0, %s27
      %p24 = scmp.ge.s32.totalorder %s23, 4
      %s30 = sphi 0, %s42
      %s31 = sphi 0, %s38
      %s32 = sphi 0, %s30
      %s33 = sphi 0, %s31
      %s34 = sphi 0, %s32
      %s35 = sphi 0, %s33
      %s45 = sphi 0, %s47
      %s48 = sphi 0, %s45
      %s49 = sphi 0, %s48
      %s65 = sphi 0, %s49
      %s69 = sphi 0, %s69
      %s71 = sphi 0, %s69
      %s72 = sphi 0, %s71
      %s86 = sphi 0, %s72
      %s92 = sphi 0, %s94
      %s95 = sphi 0, %s92
      %s96 = sphi 0, %s95
      %s112 = sphi 0, %s96
      %s118 = sphi 0, %s120
      %s121 = sphi 0, %s118
      %s122 = sphi 0, %s121
      %s138 = sphi 0, %s122
      %s144 = sphi 0, %s146
      %s147 = sphi 0, %s144
      %s148 = sphi 0, %s147
      %s164 = sphi 0, %s148
      %s170 = sphi 0, %s172
      %s173 = sphi 0, %s170
      %s174 = sphi 0, %s173
      %s190 = sphi 0, %s174
      %s196 = sphi 0, %s198
      %s199 = sphi 0, %s196
      %s200 = sphi 0, %s199
      %s216 = sphi 0, %s200
      %s222 = sphi 0, %s224
      %s225 = sphi 0, %s222
      %s226 = sphi 0, %s225
      %s242 = sphi 0, %s226
      %s248 = sphi 0, %s250
      %s251 = sphi 0, %s248
      %s252 = sphi 0, %s251
      %s268 = sphi 0, %s252
      %s274 = sphi 0, %s276
      %s277 = sphi 0, %s274
      %s278 = sphi 0, %s277
      %s294 = sphi 0, %s278
      %s300 = sphi 0, %s302
      %s303 = sphi 0, %s300
      %s304 = sphi 0, %s303
      %s320 = sphi 0, %s304
      %s326 = sphi 0, %s328
      %s329 = sphi 0, %s326
      %s330 = sphi 0, %s329
      %s346 = sphi 0, %s330
      %s352 = sphi 0, %s354
      %s355 = sphi 0, %s352
      %s356 = sphi 0, %s355
      %s372 = sphi 0, %s356
      %s378 = sphi 0, %s380
      %s381 = sphi 0, %s378
      %s382 = sphi 0, %s381
      %s398 = sphi 0, %s382
      %s404 = sphi 0, %s406
      %s407 = sphi 0, %s404
      %s408 = sphi 0, %s407
      %s424 = sphi 0, %s408
    $region4: #{tpu_custom_call.1} parent=1 // loop_header_branch
      %26 = sbr.rel (%p24) target = $region8
    $region5: #{tpu_custom_call.1} parent=1 // loop_body
      %s28 = ssub.s32 %s23, 1
      %s29 = ssub.s32 %s23, 2
      %s36 = sadd.s32 1, %s31
      %p37 = scmp.ge.s32.totalorder %s36, 2
      %s38 = scalar_select %p37, 0, %s36
      %s39 = sadd.s32 1, %s30
      %s40 = scalar_select %p37, %s39, %s30
      %p41 = scmp.ge.s32.totalorder %s40, 1
      %s42 = scalar_select %p41, 0, %s40
      %s43 = ssub.s32 %s30, %s42
      %p44 = scmp.eq.s32.totalorder %s43, 0
      %s46 = sadd.s32 %s45, 1
      %s47 = scalar_select %p44, %s45, %s46
      %p50 = pneg %p44
      %p51 = scmp.eq.s32.totalorder %s23, 1
      %p52 = por %p50, %p51
      %p53 = scmp.ne.s32.totalorder %s45, %s48
      %p54 = scmp.eq.s32.totalorder %s23, 0
      %p55 = por %p53, %p54
      %p56 = scmp.ne.s32.totalorder %s45, %s48
      %p57 = scmp.eq.s32.totalorder %s28, 1
      %p58 = por %p56, %p57
      %p59 = scmp.ne.s32.totalorder %s48, %s49
      %p60 = scmp.eq.s32.totalorder %s28, 0
      %p61 = por %p59, %p60
      %p62 = scmp.ne.s32.totalorder %s48, %s49
      %p63 = scmp.eq.s32.totalorder %s29, 1
      %p64 = por %p62, %p63
      %p66 = scmp.ne.s32.totalorder %s49, %s65
      %p67 = scmp.eq.s32.totalorder %s29, 0
      %p68 = por %p66, %p67
      %s70 = sadd.s32 %s69, 1
      %p73 = scmp.eq.s32.totalorder %s23, 1
      %p74 = scmp.ne.s32.totalorder %s69, %s71
      %p75 = scmp.eq.s32.totalorder %s23, 0
      %p76 = por %p74, %p75
      %p77 = scmp.ne.s32.totalorder %s69, %s71
      %p78 = scmp.eq.s32.totalorder %s28, 1
      %p79 = por %p77, %p78
      %p80 = scmp.ne.s32.totalorder %s71, %s72
      %p81 = scmp.eq.s32.totalorder %s28, 0
      %p82 = por %p80, %p81
      %p83 = scmp.ne.s32.totalorder %s71, %s72
      %p84 = scmp.eq.s32.totalorder %s29, 1
      %p85 = por %p83, %p84
      %p87 = scmp.ne.s32.totalorder %s72, %s86
      %p88 = scmp.eq.s32.totalorder %s29, 0
      %p89 = por %p87, %p88
      %s90 = ssub.s32 %s31, %s38
      %p91 = scmp.eq.s32.totalorder %s90, 0
      %s93 = sadd.s32 %s92, 1
      %s94 = scalar_select %p91, %s92, %s93
      %p97 = pneg %p91
      %p98 = scmp.eq.s32.totalorder %s23, 1
      %p99 = por %p97, %p98
      %p100 = scmp.ne.s32.totalorder %s92, %s95
      %p101 = scmp.eq.s32.totalorder %s23, 0
      %p102 = por %p100, %p101
      %p103 = scmp.ne.s32.totalorder %s92, %s95
      %p104 = scmp.eq.s32.totalorder %s28, 1
      %p105 = por %p103, %p104
      %p106 = scmp.ne.s32.totalorder %s95, %s96
      %p107 = scmp.eq.s32.totalorder %s28, 0
      %p108 = por %p106, %p107
      %p109 = scmp.ne.s32.totalorder %s95, %s96
      %p110 = scmp.eq.s32.totalorder %s29, 1
      %p111 = por %p109, %p110
      %p113 = scmp.ne.s32.totalorder %s96, %s112
      %p114 = scmp.eq.s32.totalorder %s29, 0
      %p115 = por %p113, %p114
      %s116 = ssub.s32 %s31, %s38
      %p117 = scmp.eq.s32.totalorder %s116, 0
      %s119 = sadd.s32 %s118, 1
      %s120 = scalar_select %p117, %s118, %s119
      %p123 = pneg %p117
      %p124 = scmp.eq.s32.totalorder %s23, 1
      %p125 = por %p123, %p124
      %p126 = scmp.ne.s32.totalorder %s118, %s121
      %p127 = scmp.eq.s32.totalorder %s23, 0
      %p128 = por %p126, %p127
      %p129 = scmp.ne.s32.totalorder %s118, %s121
      %p130 = scmp.eq.s32.totalorder %s28, 1
      %p131 = por %p129, %p130
      %p132 = scmp.ne.s32.totalorder %s121, %s122
      %p133 = scmp.eq.s32.totalorder %s28, 0
      %p134 = por %p132, %p133
      %p135 = scmp.ne.s32.totalorder %s121, %s122
      %p136 = scmp.eq.s32.totalorder %s29, 1
      %p137 = por %p135, %p136
      %p139 = scmp.ne.s32.totalorder %s122, %s138
      %p140 = scmp.eq.s32.totalorder %s29, 0
      %p141 = por %p139, %p140
      %s142 = ssub.s32 %s31, %s38
      %p143 = scmp.eq.s32.totalorder %s142, 0
      %s145 = sadd.s32 %s144, 1
      %s146 = scalar_select %p143, %s144, %s145
      %p149 = pneg %p143
      %p150 = scmp.eq.s32.totalorder %s23, 1
      %p151 = por %p149, %p150
      %p152 = scmp.ne.s32.totalorder %s144, %s147
      %p153 = scmp.eq.s32.totalorder %s23, 0
      %p154 = por %p152, %p153
      %p155 = scmp.ne.s32.totalorder %s144, %s147
      %p156 = scmp.eq.s32.totalorder %s28, 1
      %p157 = por %p155, %p156
      %p158 = scmp.ne.s32.totalorder %s147, %s148
      %p159 = scmp.eq.s32.totalorder %s28, 0
      %p160 = por %p158, %p159
      %p161 = scmp.ne.s32.totalorder %s147, %s148
      %p162 = scmp.eq.s32.totalorder %s29, 1
      %p163 = por %p161, %p162
      %p165 = scmp.ne.s32.totalorder %s148, %s164
      %p166 = scmp.eq.s32.totalorder %s29, 0
      %p167 = por %p165, %p166
      %s168 = ssub.s32 %s31, %s38
      %p169 = scmp.eq.s32.totalorder %s168, 0
      %s171 = sadd.s32 %s170, 1
      %s172 = scalar_select %p169, %s170, %s171
      %p175 = pneg %p169
      %p176 = scmp.eq.s32.totalorder %s23, 1
      %p177 = por %p175, %p176
      %p178 = scmp.ne.s32.totalorder %s170, %s173
      %p179 = scmp.eq.s32.totalorder %s23, 0
      %p180 = por %p178, %p179
      %p181 = scmp.ne.s32.totalorder %s170, %s173
      %p182 = scmp.eq.s32.totalorder %s28, 1
      %p183 = por %p181, %p182
      %p184 = scmp.ne.s32.totalorder %s173, %s174
      %p185 = scmp.eq.s32.totalorder %s28, 0
      %p186 = por %p184, %p185
      %p187 = scmp.ne.s32.totalorder %s173, %s174
      %p188 = scmp.eq.s32.totalorder %s29, 1
      %p189 = por %p187, %p188
      %p191 = scmp.ne.s32.totalorder %s174, %s190
      %p192 = scmp.eq.s32.totalorder %s29, 0
      %p193 = por %p191, %p192
      %s194 = ssub.s32 %s31, %s38
      %p195 = scmp.eq.s32.totalorder %s194, 0
      %s197 = sadd.s32 %s196, 1
      %s198 = scalar_select %p195, %s196, %s197
      %p201 = pneg %p195
      %p202 = scmp.eq.s32.totalorder %s23, 1
      %p203 = por %p201, %p202
      %p204 = scmp.ne.s32.totalorder %s196, %s199
      %p205 = scmp.eq.s32.totalorder %s23, 0
      %p206 = por %p204, %p205
      %p207 = scmp.ne.s32.totalorder %s196, %s199
      %p208 = scmp.eq.s32.totalorder %s28, 1
      %p209 = por %p207, %p208
      %p210 = scmp.ne.s32.totalorder %s199, %s200
      %p211 = scmp.eq.s32.totalorder %s28, 0
      %p212 = por %p210, %p211
      %p213 = scmp.ne.s32.totalorder %s199, %s200
      %p214 = scmp.eq.s32.totalorder %s29, 1
      %p215 = por %p213, %p214
      %p217 = scmp.ne.s32.totalorder %s200, %s216
      %p218 = scmp.eq.s32.totalorder %s29, 0
      %p219 = por %p217, %p218
      %s220 = ssub.s32 %s31, %s38
      %p221 = scmp.eq.s32.totalorder %s220, 0
      %s223 = sadd.s32 %s222, 1
      %s224 = scalar_select %p221, %s222, %s223
      %p227 = pneg %p221
      %p228 = scmp.eq.s32.totalorder %s23, 1
      %p229 = por %p227, %p228
      %p230 = scmp.ne.s32.totalorder %s222, %s225
      %p231 = scmp.eq.s32.totalorder %s23, 0
      %p232 = por %p230, %p231
      %p233 = scmp.ne.s32.totalorder %s222, %s225
      %p234 = scmp.eq.s32.totalorder %s28, 1
      %p235 = por %p233, %p234
      %p236 = scmp.ne.s32.totalorder %s225, %s226
      %p237 = scmp.eq.s32.totalorder %s28, 0
      %p238 = por %p236, %p237
      %p239 = scmp.ne.s32.totalorder %s225, %s226
      %p240 = scmp.eq.s32.totalorder %s29, 1
      %p241 = por %p239, %p240
      %p243 = scmp.ne.s32.totalorder %s226, %s242
      %p244 = scmp.eq.s32.totalorder %s29, 0
      %p245 = por %p243, %p244
      %s246 = ssub.s32 %s31, %s38
      %p247 = scmp.eq.s32.totalorder %s246, 0
      %s249 = sadd.s32 %s248, 1
      %s250 = scalar_select %p247, %s248, %s249
      %p253 = pneg %p247
      %p254 = scmp.eq.s32.totalorder %s23, 1
      %p255 = por %p253, %p254
      %p256 = scmp.ne.s32.totalorder %s248, %s251
      %p257 = scmp.eq.s32.totalorder %s23, 0
      %p258 = por %p256, %p257
      %p259 = scmp.ne.s32.totalorder %s248, %s251
      %p260 = scmp.eq.s32.totalorder %s28, 1
      %p261 = por %p259, %p260
      %p262 = scmp.ne.s32.totalorder %s251, %s252
      %p263 = scmp.eq.s32.totalorder %s28, 0
      %p264 = por %p262, %p263
      %p265 = scmp.ne.s32.totalorder %s251, %s252
      %p266 = scmp.eq.s32.totalorder %s29, 1
      %p267 = por %p265, %p266
      %p269 = scmp.ne.s32.totalorder %s252, %s268
      %p270 = scmp.eq.s32.totalorder %s29, 0
      %p271 = por %p269, %p270
      %s272 = ssub.s32 %s31, %s38
      %p273 = scmp.eq.s32.totalorder %s272, 0
      %s275 = sadd.s32 %s274, 1
      %s276 = scalar_select %p273, %s274, %s275
      %p279 = pneg %p273
      %p280 = scmp.eq.s32.totalorder %s23, 1
      %p281 = por %p279, %p280
      %p282 = scmp.ne.s32.totalorder %s274, %s277
      %p283 = scmp.eq.s32.totalorder %s23, 0
      %p284 = por %p282, %p283
      %p285 = scmp.ne.s32.totalorder %s274, %s277
      %p286 = scmp.eq.s32.totalorder %s28, 1
      %p287 = por %p285, %p286
      %p288 = scmp.ne.s32.totalorder %s277, %s278
      %p289 = scmp.eq.s32.totalorder %s28, 0
      %p290 = por %p288, %p289
      %p291 = scmp.ne.s32.totalorder %s277, %s278
      %p292 = scmp.eq.s32.totalorder %s29, 1
      %p293 = por %p291, %p292
      %p295 = scmp.ne.s32.totalorder %s278, %s294
      %p296 = scmp.eq.s32.totalorder %s29, 0
      %p297 = por %p295, %p296
      %s298 = ssub.s32 %s31, %s38
      %p299 = scmp.eq.s32.totalorder %s298, 0
      %s301 = sadd.s32 %s300, 1
      %s302 = scalar_select %p299, %s300, %s301
      %p305 = pneg %p299
      %p306 = scmp.eq.s32.totalorder %s23, 1
      %p307 = por %p305, %p306
      %p308 = scmp.ne.s32.totalorder %s300, %s303
      %p309 = scmp.eq.s32.totalorder %s23, 0
      %p310 = por %p308, %p309
      %p311 = scmp.ne.s32.totalorder %s300, %s303
      %p312 = scmp.eq.s32.totalorder %s28, 1
      %p313 = por %p311, %p312
      %p314 = scmp.ne.s32.totalorder %s303, %s304
      %p315 = scmp.eq.s32.totalorder %s28, 0
      %p316 = por %p314, %p315
      %p317 = scmp.ne.s32.totalorder %s303, %s304
      %p318 = scmp.eq.s32.totalorder %s29, 1
      %p319 = por %p317, %p318
      %p321 = scmp.ne.s32.totalorder %s304, %s320
      %p322 = scmp.eq.s32.totalorder %s29, 0
      %p323 = por %p321, %p322
      %s324 = ssub.s32 %s31, %s38
      %p325 = scmp.eq.s32.totalorder %s324, 0
      %s327 = sadd.s32 %s326, 1
      %s328 = scalar_select %p325, %s326, %s327
      %p331 = pneg %p325
      %p332 = scmp.eq.s32.totalorder %s23, 1
      %p333 = por %p331, %p332
      %p334 = scmp.ne.s32.totalorder %s326, %s329
      %p335 = scmp.eq.s32.totalorder %s23, 0
      %p336 = por %p334, %p335
      %p337 = scmp.ne.s32.totalorder %s326, %s329
      %p338 = scmp.eq.s32.totalorder %s28, 1
      %p339 = por %p337, %p338
      %p340 = scmp.ne.s32.totalorder %s329, %s330
      %p341 = scmp.eq.s32.totalorder %s28, 0
      %p342 = por %p340, %p341
      %p343 = scmp.ne.s32.totalorder %s329, %s330
      %p344 = scmp.eq.s32.totalorder %s29, 1
      %p345 = por %p343, %p344
      %p347 = scmp.ne.s32.totalorder %s330, %s346
      %p348 = scmp.eq.s32.totalorder %s29, 0
      %p349 = por %p347, %p348
      %s350 = ssub.s32 %s31, %s38
      %p351 = scmp.eq.s32.totalorder %s350, 0
      %s353 = sadd.s32 %s352, 1
      %s354 = scalar_select %p351, %s352, %s353
      %p357 = pneg %p351
      %p358 = scmp.eq.s32.totalorder %s23, 1
      %p359 = por %p357, %p358
      %p360 = scmp.ne.s32.totalorder %s352, %s355
      %p361 = scmp.eq.s32.totalorder %s23, 0
      %p362 = por %p360, %p361
      %p363 = scmp.ne.s32.totalorder %s352, %s355
      %p364 = scmp.eq.s32.totalorder %s28, 1
      %p365 = por %p363, %p364
      %p366 = scmp.ne.s32.totalorder %s355, %s356
      %p367 = scmp.eq.s32.totalorder %s28, 0
      %p368 = por %p366, %p367
      %p369 = scmp.ne.s32.totalorder %s355, %s356
      %p370 = scmp.eq.s32.totalorder %s29, 1
      %p371 = por %p369, %p370
      %p373 = scmp.ne.s32.totalorder %s356, %s372
      %p374 = scmp.eq.s32.totalorder %s29, 0
      %p375 = por %p373, %p374
      %s376 = ssub.s32 %s31, %s38
      %p377 = scmp.eq.s32.totalorder %s376, 0
      %s379 = sadd.s32 %s378, 1
      %s380 = scalar_select %p377, %s378, %s379
      %p383 = pneg %p377
      %p384 = scmp.eq.s32.totalorder %s23, 1
      %p385 = por %p383, %p384
      %p386 = scmp.ne.s32.totalorder %s378, %s381
      %p387 = scmp.eq.s32.totalorder %s23, 0
      %p388 = por %p386, %p387
      %p389 = scmp.ne.s32.totalorder %s378, %s381
      %p390 = scmp.eq.s32.totalorder %s28, 1
      %p391 = por %p389, %p390
      %p392 = scmp.ne.s32.totalorder %s381, %s382
      %p393 = scmp.eq.s32.totalorder %s28, 0
      %p394 = por %p392, %p393
      %p395 = scmp.ne.s32.totalorder %s381, %s382
      %p396 = scmp.eq.s32.totalorder %s29, 1
      %p397 = por %p395, %p396
      %p399 = scmp.ne.s32.totalorder %s382, %s398
      %p400 = scmp.eq.s32.totalorder %s29, 0
      %p401 = por %p399, %p400
      %s402 = ssub.s32 %s30, %s42
      %p403 = scmp.eq.s32.totalorder %s402, 0
      %s405 = sadd.s32 %s404, 1
      %s406 = scalar_select %p403, %s404, %s405
      %p409 = pneg %p403
      %p410 = scmp.eq.s32.totalorder %s23, 1
      %p411 = por %p409, %p410
      %p412 = scmp.ne.s32.totalorder %s404, %s407
      %p413 = scmp.eq.s32.totalorder %s23, 0
      %p414 = por %p412, %p413
      %p415 = scmp.ne.s32.totalorder %s404, %s407
      %p416 = scmp.eq.s32.totalorder %s28, 1
      %p417 = por %p415, %p416
      %p418 = scmp.ne.s32.totalorder %s407, %s408
      %p419 = scmp.eq.s32.totalorder %s28, 0
      %p420 = por %p418, %p419
      %p421 = scmp.ne.s32.totalorder %s407, %s408
      %p422 = scmp.eq.s32.totalorder %s29, 1
      %p423 = por %p421, %p422
      %p425 = scmp.ne.s32.totalorder %s408, %s424
      %p426 = scmp.eq.s32.totalorder %s29, 0
      %p427 = por %p425, %p426
      %p428 = scmp.le.s32.totalorder 1, %s23
      %p429 = scmp.lt.s32.totalorder %s23, 3
      %p430 = pnand %p428, %p429
      %p431 = pneg %p430
      // Predicated region
      $region9: #{tpu_custom_call.1} parent=5 // pred_check
        _
      $region10: #{tpu_custom_call.1} parent=5 // pred_check_branch
        %433 = sbr.rel (%p430) target = $region12
      $region11: #{tpu_custom_call.1} parent=5 // pred_region
        %s434 = ssub.s32 %s23, 1
        // Predicated region
        $region13: #{tpu_custom_call.1} parent=11 // pred_check
          %p435 = pneg %p61
        $region14: #{tpu_custom_call.1} parent=11 // pred_check_branch
          %437 = sbr.rel (%p435) target = $region16
        $region15: #{tpu_custom_call.1} parent=11 // pred_region
          %s438 = smul.u32 2, %s32
          %s440 = ssub.s32 256, 256
          %441 = vsyncadd [#allocation4], %s440
          %s442 = smul.addr %s438, 128
          %s443 = scalar_lea.hbm %s0, %s442
          %s444 = sshll.u32 [#allocation3], 4
          %s445 = int_to_ptr.vmem [resolvable:$true] %s444
          %450 = dma.hbm_to_vmem [thread:$0]  %s443, 256, %s445, [#allocation4], 128, 128, 8
        $region16: #{tpu_custom_call.1} parent=11 // pred_fallthru
          _
        // Predicated region
        $region17: #{tpu_custom_call.1} parent=11 // pred_check
          %p451 = pneg %p82
        $region18: #{tpu_custom_call.1} parent=11 // pred_check_branch
          %453 = sbr.rel (%p451) target = $region20
        $region19: #{tpu_custom_call.1} parent=11 // pred_region
          %s455 = ssub.s32 128, 128
          %456 = vsyncadd [#allocation7], %s455
          %s458 = sshll.u32 [#allocation6], 4
          %s459 = int_to_ptr.vmem [resolvable:$true] %s458
          %461 = dma.hbm_to_vmem [thread:$0]  %s1, 128, %s459, [#allocation7]
        $region20: #{tpu_custom_call.1} parent=11 // pred_fallthru
          _
      $region12: #{tpu_custom_call.1} parent=5 // pred_fallthru
        _
      %p462 = scmp.lt.s32.totalorder %s23, 2
      // Predicated region
      $region21: #{tpu_custom_call.1} parent=5 // pred_check
        %p463 = pneg %p462
      $region22: #{tpu_custom_call.1} parent=5 // pred_check_branch
        %465 = sbr.rel (%p463) target = $region24
      $region23: #{tpu_custom_call.1} parent=5 // pred_region
        // Predicated region
        $region25: #{tpu_custom_call.1} parent=23 // pred_check
          %p466 = pneg %p102
        $region26: #{tpu_custom_call.1} parent=23 // pred_check_branch
          %468 = sbr.rel (%p466) target = $region28
        $region27: #{tpu_custom_call.1} parent=23 // pred_region
          %s469 = sand.u32 %s23, 1
          %s470 = scalar_lea.sflag [#allocation4], %s469
          %s471 = sand.u32 %s92, 1
          %s472 = smul.addr %s471, 192
          %s473 = scalar_lea.vmem [#allocation8], %s472
          %s475 = ssub.s32 3072, 3072
          %476 = vsyncadd %s470, %s475
          %s477 = smul.addr %s31, 48
          %s478 = smul.addr %s477, 64
          %s479 = scalar_lea.hbm %s2, %s478
          %s480 = sshll.u32 %s473, 4
          %s481 = int_to_ptr.vmem [resolvable:$true] %s480
          %486 = dma.hbm_to_vmem [thread:$0]  %s479, 3072, %s481, %s470, 192, 192, 12
        $region28: #{tpu_custom_call.1} parent=23 // pred_fallthru
          _
        // Predicated region
        $region29: #{tpu_custom_call.1} parent=23 // pred_check
          %p487 = pneg %p128
        $region30: #{tpu_custom_call.1} parent=23 // pred_check_branch
          %489 = sbr.rel (%p487) target = $region32
        $region31: #{tpu_custom_call.1} parent=23 // pred_region
          %p490 = scmp.lt.s32.totalorder %s31, 1
          %s491 = scalar_select %p490, %s31, 1
          %s492 = smul.addr %s491, 3
          %s493 = scalar_lea.vmem %s3, %s492
        $region32: #{tpu_custom_call.1} parent=23 // pred_fallthru
          _
        // Predicated region
        $region33: #{tpu_custom_call.1} parent=23 // pred_check
          %p494 = pneg %p154
        $region34: #{tpu_custom_call.1} parent=23 // pred_check_branch
          %496 = sbr.rel (%p494) target = $region36
        $region35: #{tpu_custom_call.1} parent=23 // pred_region
          %s497 = sand.u32 %s23, 1
          %s498 = scalar_lea.sflag [#allocation4], %s497
          %s499 = sand.u32 %s144, 1
          %s500 = smul.addr %s499, 64
          %s501 = scalar_lea.vmem [#allocation9], %s500
          %s503 = ssub.s32 1024, 1024
          %504 = vsyncadd %s498, %s503
          %s505 = smul.addr %s31, 16
          %s506 = smul.addr %s505, 64
          %s507 = scalar_lea.hbm %s4, %s506
          %s508 = sshll.u32 %s501, 4
          %s509 = int_to_ptr.vmem [resolvable:$true] %s508
          %514 = dma.hbm_to_vmem [thread:$0]  %s507, 1024, %s509, %s498, 64, 64, 4
        $region36: #{tpu_custom_call.1} parent=23 // pred_fallthru
          _
        // Predicated region
        $region37: #{tpu_custom_call.1} parent=23 // pred_check
          %p515 = pneg %p180
        $region38: #{tpu_custom_call.1} parent=23 // pred_check_branch
          %517 = sbr.rel (%p515) target = $region40
        $region39: #{tpu_custom_call.1} parent=23 // pred_region
          %p518 = scmp.lt.s32.totalorder %s31, 1
          %s519 = scalar_select %p518, %s31, 1
          %s520 = scalar_lea.vmem %s5, %s519
        $region40: #{tpu_custom_call.1} parent=23 // pred_fallthru
          _
        // Predicated region
        $region41: #{tpu_custom_call.1} parent=23 // pred_check
          %p521 = pneg %p206
        $region42: #{tpu_custom_call.1} parent=23 // pred_check_branch
          %523 = sbr.rel (%p521) target = $region44
        $region43: #{tpu_custom_call.1} parent=23 // pred_region
          %s524 = sand.u32 %s23, 1
          %s525 = scalar_lea.sflag [#allocation4], %s524
          %s526 = sand.u32 %s196, 1
          %s527 = smul.addr %s526, 128
          %s528 = scalar_lea.vmem [#allocation10], %s527
          %s530 = ssub.s32 2048, 2048
          %531 = vsyncadd %s525, %s530
          %s532 = smul.addr %s31, 32
          %s533 = smul.addr %s532, 64
          %s534 = scalar_lea.hbm %s6, %s533
          %s535 = sshll.u32 %s528, 4
          %s536 = int_to_ptr.vmem [resolvable:$true] %s535
          %541 = dma.hbm_to_vmem [thread:$0]  %s534, 2048, %s536, %s525, 128, 128, 8
        $region44: #{tpu_custom_call.1} parent=23 // pred_fallthru
          _
        // Predicated region
        $region45: #{tpu_custom_call.1} parent=23 // pred_check
          %p542 = pneg %p232
        $region46: #{tpu_custom_call.1} parent=23 // pred_check_branch
          %544 = sbr.rel (%p542) target = $region48
        $region47: #{tpu_custom_call.1} parent=23 // pred_region
          %p545 = scmp.lt.s32.totalorder %s31, 1
          %s546 = scalar_select %p545, %s31, 1
          %s547 = smul.addr %s546, 2
          %s548 = scalar_lea.vmem %s7, %s547
        $region48: #{tpu_custom_call.1} parent=23 // pred_fallthru
          _
        // Predicated region
        $region49: #{tpu_custom_call.1} parent=23 // pred_check
          %p549 = pneg %p258
        $region50: #{tpu_custom_call.1} parent=23 // pred_check_branch
          %551 = sbr.rel (%p549) target = $region52
        $region51: #{tpu_custom_call.1} parent=23 // pred_region
          %s552 = sand.u32 %s23, 1
          %s553 = scalar_lea.sflag [#allocation4], %s552
          %s554 = sand.u32 %s248, 1
          %s555 = smul.addr %s554, 128
          %s556 = scalar_lea.vmem [#allocation11], %s555
          %s558 = ssub.s32 2048, 2048
          %559 = vsyncadd %s553, %s558
          %s560 = smul.addr %s31, 32
          %s561 = smul.addr %s560, 64
          %s562 = scalar_lea.hbm %s8, %s561
          %s563 = sshll.u32 %s556, 4
          %s564 = int_to_ptr.vmem [resolvable:$true] %s563
          %569 = dma.hbm_to_vmem [thread:$0]  %s562, 2048, %s564, %s553, 64, 64, 4
        $region52: #{tpu_custom_call.1} parent=23 // pred_fallthru
          _
        // Predicated region
        $region53: #{tpu_custom_call.1} parent=23 // pred_check
          %p570 = pneg %p284
        $region54: #{tpu_custom_call.1} parent=23 // pred_check_branch
          %572 = sbr.rel (%p570) target = $region56
        $region55: #{tpu_custom_call.1} parent=23 // pred_region
          %p573 = scmp.lt.s32.totalorder %s31, 1
          %s574 = scalar_select %p573, %s31, 1
          %s575 = scalar_lea.vmem %s9, %s574
        $region56: #{tpu_custom_call.1} parent=23 // pred_fallthru
          _
        // Predicated region
        $region57: #{tpu_custom_call.1} parent=23 // pred_check
          %p576 = pneg %p310
        $region58: #{tpu_custom_call.1} parent=23 // pred_check_branch
          %578 = sbr.rel (%p576) target = $region60
        $region59: #{tpu_custom_call.1} parent=23 // pred_region
          %p579 = scmp.lt.s32.totalorder %s31, 1
          %s580 = scalar_select %p579, %s31, 1
          %s581 = scalar_lea.vmem %s10, %s580
        $region60: #{tpu_custom_call.1} parent=23 // pred_fallthru
          _
        // Predicated region
        $region61: #{tpu_custom_call.1} parent=23 // pred_check
          %p582 = pneg %p336
        $region62: #{tpu_custom_call.1} parent=23 // pred_check_branch
          %584 = sbr.rel (%p582) target = $region64
        $region63: #{tpu_custom_call.1} parent=23 // pred_region
          %p585 = scmp.lt.s32.totalorder %s31, 1
          %s586 = scalar_select %p585, %s31, 1
          %s587 = scalar_lea.vmem %s11, %s586
        $region64: #{tpu_custom_call.1} parent=23 // pred_fallthru
          _
        // Predicated region
        $region65: #{tpu_custom_call.1} parent=23 // pred_check
          %p588 = pneg %p362
        $region66: #{tpu_custom_call.1} parent=23 // pred_check_branch
          %590 = sbr.rel (%p588) target = $region68
        $region67: #{tpu_custom_call.1} parent=23 // pred_region
          %p591 = scmp.lt.s32.totalorder %s31, 1
          %s592 = scalar_select %p591, %s31, 1
          %s593 = scalar_lea.vmem %s12, %s592
        $region68: #{tpu_custom_call.1} parent=23 // pred_fallthru
          _
        // Predicated region
        $region69: #{tpu_custom_call.1} parent=23 // pred_check
          %p594 = pneg %p388
        $region70: #{tpu_custom_call.1} parent=23 // pred_check_branch
          %596 = sbr.rel (%p594) target = $region72
        $region71: #{tpu_custom_call.1} parent=23 // pred_region
          %p597 = scmp.lt.s32.totalorder %s31, 1
          %s598 = scalar_select %p597, %s31, 1
          %s599 = scalar_lea.vmem %s13, %s598
        $region72: #{tpu_custom_call.1} parent=23 // pred_fallthru
          _
      $region24: #{tpu_custom_call.1} parent=5 // pred_fallthru
        _
      %p600 = scmp.le.s32.totalorder 1, %s23
      %p601 = scmp.lt.s32.totalorder %s23, 3
      %p602 = pnand %p600, %p601
      %p603 = pneg %p602
      // Predicated region
      $region73: #{tpu_custom_call.1} parent=5 // pred_check
        _
      $region74: #{tpu_custom_call.1} parent=5 // pred_check_branch
        %605 = sbr.rel (%p602) target = $region76
      $region75: #{tpu_custom_call.1} parent=5 // pred_region
        %s606 = ssub.s32 %s23, 1
        // Predicated region
        $region77: #{tpu_custom_call.1} parent=75 // pred_check
          %p607 = pneg %p61
        $region78: #{tpu_custom_call.1} parent=75 // pred_check_branch
          %609 = sbr.rel (%p607) target = $region80
        $region79: #{tpu_custom_call.1} parent=75 // pred_region
          %610 = dma.done [#allocation4], 256
        $region80: #{tpu_custom_call.1} parent=75 // pred_fallthru
          _
        // Predicated region
        $region81: #{tpu_custom_call.1} parent=75 // pred_check
          %p611 = pneg %p82
        $region82: #{tpu_custom_call.1} parent=75 // pred_check_branch
          %613 = sbr.rel (%p611) target = $region84
        $region83: #{tpu_custom_call.1} parent=75 // pred_region
          %614 = dma.done [#allocation7], 128
        $region84: #{tpu_custom_call.1} parent=75 // pred_fallthru
          _
        %s615 = sand.u32 %s28, 1
        %s616 = scalar_lea.sflag [#allocation4], %s615
        %s617 = sand.u32 %s95, 1
        %s618 = smul.addr %s617, 192
        %s619 = scalar_lea.vmem [#allocation8], %s618
        // Predicated region
        $region85: #{tpu_custom_call.1} parent=75 // pred_check
          %p620 = pneg %p108
        $region86: #{tpu_custom_call.1} parent=75 // pred_check_branch
          %622 = sbr.rel (%p620) target = $region88
        $region87: #{tpu_custom_call.1} parent=75 // pred_region
          %623 = dma.done %s616, 3072
        $region88: #{tpu_custom_call.1} parent=75 // pred_fallthru
          _
        %s624 = sand.u32 %s28, 1
        %s625 = scalar_lea.sflag [#allocation4], %s624
        %s626 = sand.u32 %s147, 1
        %s627 = smul.addr %s626, 64
        %s628 = scalar_lea.vmem [#allocation9], %s627
        // Predicated region
        $region89: #{tpu_custom_call.1} parent=75 // pred_check
          %p629 = pneg %p160
        $region90: #{tpu_custom_call.1} parent=75 // pred_check_branch
          %631 = sbr.rel (%p629) target = $region92
        $region91: #{tpu_custom_call.1} parent=75 // pred_region
          %632 = dma.done %s625, 1024
        $region92: #{tpu_custom_call.1} parent=75 // pred_fallthru
          _
        %s633 = sand.u32 %s28, 1
        %s634 = scalar_lea.sflag [#allocation4], %s633
        %s635 = sand.u32 %s199, 1
        %s636 = smul.addr %s635, 128
        %s637 = scalar_lea.vmem [#allocation10], %s636
        // Predicated region
        $region93: #{tpu_custom_call.1} parent=75 // pred_check
          %p638 = pneg %p212
        $region94: #{tpu_custom_call.1} parent=75 // pred_check_branch
          %640 = sbr.rel (%p638) target = $region96
        $region95: #{tpu_custom_call.1} parent=75 // pred_region
          %641 = dma.done %s634, 2048
        $region96: #{tpu_custom_call.1} parent=75 // pred_fallthru
          _
        %s642 = sand.u32 %s28, 1
        %s643 = scalar_lea.sflag [#allocation4], %s642
        %s644 = sand.u32 %s251, 1
        %s645 = smul.addr %s644, 128
        %s646 = scalar_lea.vmem [#allocation11], %s645
        // Predicated region
        $region97: #{tpu_custom_call.1} parent=75 // pred_check
          %p647 = pneg %p264
        $region98: #{tpu_custom_call.1} parent=75 // pred_check_branch
          %649 = sbr.rel (%p647) target = $region100
        $region99: #{tpu_custom_call.1} parent=75 // pred_region
          %650 = dma.done %s643, 2048
        $region100: #{tpu_custom_call.1} parent=75 // pred_fallthru
          _
        %p651 = pneg %p61
        %p652 = pneg %p58
        %p653 = pneg %p82
        %p654 = pneg %p79
        %s655 = sand.u32 %s28, 1
        %s656 = scalar_lea.sflag [#allocation4], %s655
        %s657 = sand.u32 %s95, 1
        %s658 = smul.addr %s657, 192
        %s659 = scalar_lea.vmem [#allocation8], %s658
        %p660 = pneg %p108
        %p661 = pneg %p105
        %p662 = scmp.lt.s32.totalorder %s33, 1
        %s663 = scalar_select %p662, %s33, 1
        %s664 = smul.addr %s663, 3
        %s665 = scalar_lea.vmem %s3, %s664
        %p666 = pneg %p134
        %p667 = pneg %p131
        %s668 = sand.u32 %s28, 1
        %s669 = scalar_lea.sflag [#allocation4], %s668
        %s670 = sand.u32 %s147, 1
        %s671 = smul.addr %s670, 64
        %s672 = scalar_lea.vmem [#allocation9], %s671
        %p673 = pneg %p160
        %p674 = pneg %p157
        %p675 = scmp.lt.s32.totalorder %s33, 1
        %s676 = scalar_select %p675, %s33, 1
        %s677 = scalar_lea.vmem %s5, %s676
        %p678 = pneg %p186
        %p679 = pneg %p183
        %s680 = sand.u32 %s28, 1
        %s681 = scalar_lea.sflag [#allocation4], %s680
        %s682 = sand.u32 %s199, 1
        %s683 = smul.addr %s682, 128
        %s684 = scalar_lea.vmem [#allocation10], %s683
        %p685 = pneg %p212
        %p686 = pneg %p209
        %p687 = scmp.lt.s32.totalorder %s33, 1
        %s688 = scalar_select %p687, %s33, 1
        %s689 = smul.addr %s688, 2
        %s690 = scalar_lea.vmem %s7, %s689
        %p691 = pneg %p238
        %p692 = pneg %p235
        %s693 = sand.u32 %s28, 1
        %s694 = scalar_lea.sflag [#allocation4], %s693
        %s695 = sand.u32 %s251, 1
        %s696 = smul.addr %s695, 128
        %s697 = scalar_lea.vmem [#allocation11], %s696
        %p698 = pneg %p264
        %p699 = pneg %p261
        %p700 = scmp.lt.s32.totalorder %s33, 1
        %s701 = scalar_select %p700, %s33, 1
        %s702 = scalar_lea.vmem %s9, %s701
        %p703 = pneg %p290
        %p704 = pneg %p287
        %p705 = scmp.lt.s32.totalorder %s33, 1
        %s706 = scalar_select %p705, %s33, 1
        %s707 = scalar_lea.vmem %s10, %s706
        %p708 = pneg %p316
        %p709 = pneg %p313
        %p710 = scmp.lt.s32.totalorder %s33, 1
        %s711 = scalar_select %p710, %s33, 1
        %s712 = scalar_lea.vmem %s11, %s711
        %p713 = pneg %p342
        %p714 = pneg %p339
        %p715 = scmp.lt.s32.totalorder %s33, 1
        %s716 = scalar_select %p715, %s33, 1
        %s717 = scalar_lea.vmem %s12, %s716
        %p718 = pneg %p368
        %p719 = pneg %p365
        %p720 = scmp.lt.s32.totalorder %s33, 1
        %s721 = scalar_select %p720, %s33, 1
        %s722 = scalar_lea.vmem %s13, %s721
        %p723 = pneg %p394
        %p724 = pneg %p391
        %p725 = pneg %p420
        %p726 = pneg %p417
        %s727 = smul.u32 2, %s32
        %p728 = scmp.lt.s32.totalorder %s33, 1
        %s729 = scalar_select %p728, %s33, 1
        %s730 = smul.addr %s729, 3
        %s731 = scalar_lea.vmem %s3, %s730
        %p732 = scmp.lt.s32.totalorder %s33, 1
        %s733 = scalar_select %p732, %s33, 1
        %s734 = scalar_lea.vmem %s5, %s733
        %p735 = scmp.lt.s32.totalorder %s33, 1
        %s736 = scalar_select %p735, %s33, 1
        %s737 = smul.addr %s736, 2
        %s738 = scalar_lea.vmem %s7, %s737
        %p739 = scmp.lt.s32.totalorder %s33, 1
        %s740 = scalar_select %p739, %s33, 1
        %s741 = scalar_lea.vmem %s9, %s740
        %p742 = scmp.lt.s32.totalorder %s33, 1
        %s743 = scalar_select %p742, %s33, 1
        %s744 = scalar_lea.vmem %s10, %s743
        %p745 = scmp.lt.s32.totalorder %s33, 1
        %s746 = scalar_select %p745, %s33, 1
        %s747 = scalar_lea.vmem %s11, %s746
        %p748 = scmp.lt.s32.totalorder %s33, 1
        %s749 = scalar_select %p748, %s33, 1
        %s750 = scalar_lea.vmem %s12, %s749
        %p751 = scmp.lt.s32.totalorder %s33, 1
        %s752 = scalar_select %p751, %s33, 1
        %s753 = scalar_lea.vmem %s13, %s752
        %s754 = smul.u32 2, %s32
        %p756 = scmp.eq.s32.totalorder %s33, 0
        // Predicated region
        $region101: #{tpu_custom_call.1} parent=75 // pred_check
          %p757 = pneg %p756
        $region102: #{tpu_custom_call.1} parent=75 // pred_check_branch
          %759 = sbr.rel (%p757) target = $region104
        $region103: #{tpu_custom_call.1} parent=75 // pred_region
          %v760 = vld [vmem:[#allocation3] sm:$0xff]
          %v761 = vld [vmem:[#allocation3 + $0x8] sm:$0xff]
          %v762 = vld [vmem:[#allocation6] sm:$0xff]
          %v763 = vadd.f32 %v760, %v762
          %v764 = vadd.f32 %v761, %v762
          %765 = vst [vmem:[#allocation2] sm:$0xff] %v763
          %766 = vst [vmem:[#allocation2 + $0x8] sm:$0xff] %v764
        $region104: #{tpu_custom_call.1} parent=75 // pred_fallthru
          _
        %v767 = vld [vmem:[#allocation2] sm:$0xff]
        %v768 = vld [vmem:[#allocation2 + $0x8] sm:$0xff]
        %v769 = vpack.c.bf16 %v768, %v767
        %v770 = vld [vmem:[%s619] sm:$0xff]
        %v771 = vld [vmem:[%s619 + $0x8] sm:$0xf]
        %v772 = vld [vmem:[%s619 + $0xc] sm:$0xff]
        %v773 = vld [vmem:[%s619 + $0x14] sm:$0xf]
        %v774 = vld [vmem:[%s619 + $0x18] sm:$0xff]
        %v775 = vld [vmem:[%s619 + $0x20] sm:$0xf]
        %v776 = vld [vmem:[%s619 + $0x24] sm:$0xff]
        %v777 = vld [vmem:[%s619 + $0x2c] sm:$0xf]
        %v778 = vld [vmem:[%s619 + $0x30] sm:$0xff]
        %v779 = vld [vmem:[%s619 + $0x38] sm:$0xf]
        %v780 = vld [vmem:[%s619 + $0x3c] sm:$0xff]
        %v781 = vld [vmem:[%s619 + $0x44] sm:$0xf]
        %v782 = vld [vmem:[%s619 + $0x48] sm:$0xff]
        %v783 = vld [vmem:[%s619 + $0x50] sm:$0xf]
        %v784 = vld [vmem:[%s619 + $0x54] sm:$0xff]
        %v785 = vld [vmem:[%s619 + $0x5c] sm:$0xf]
        %v786 = vld [vmem:[%s619 + $0x60] sm:$0xff]
        %v787 = vld [vmem:[%s619 + $0x68] sm:$0xf]
        %v788 = vld [vmem:[%s619 + $0x6c] sm:$0xff]
        %v789 = vld [vmem:[%s619 + $0x74] sm:$0xf]
        %v790 = vld [vmem:[%s619 + $0x78] sm:$0xff]
        %v791 = vld [vmem:[%s619 + $0x80] sm:$0xf]
        %v792 = vld [vmem:[%s619 + $0x84] sm:$0xff]
        %v793 = vld [vmem:[%s619 + $0x8c] sm:$0xf]
        %v794 = vld [vmem:[%s619 + $0x90] sm:$0xff]
        %v795 = vld [vmem:[%s619 + $0x98] sm:$0xf]
        %v796 = vld [vmem:[%s619 + $0x9c] sm:$0xff]
        %v797 = vld [vmem:[%s619 + $0xa4] sm:$0xf]
        %v798 = vld [vmem:[%s619 + $0xa8] sm:$0xff]
        %v799 = vld [vmem:[%s619 + $0xb0] sm:$0xf]
        %v800 = vld [vmem:[%s619 + $0xb4] sm:$0xff]
        %v801 = vld [vmem:[%s619 + $0xbc] sm:$0xf]
        %v802 = vld [vmem:[%s731] sm:$0x7]
        %v804 = vlaneseq
        %v805 = vshrl.u32 %v804, 7
        %v806 = vsub.s32 0, %v805
        %v807 = vrot.slane %v802, %v806
        %v808 = vlaneseq
        %v809 = vshrl.u32 %v808, 7
        %v810 = vsub.s32 1, %v809
        %v811 = vrot.slane %v802, %v810
        %v812 = vlaneseq
        %v813 = vshrl.u32 %v812, 7
        %v814 = vsub.s32 2, %v813
        %v815 = vrot.slane %v802, %v814
        %v851 = vunpack.c.l.b16 %v770
        %v852 = vunpack.c.h.b16 %v770
        %v853 = vunpack.c.l.b16 %v771
        %v854 = vunpack.c.l.b16 %v772
        %v855 = vunpack.c.h.b16 %v772
        %v856 = vunpack.c.l.b16 %v773
        %v857 = vunpack.c.l.b16 %v774
        %v858 = vunpack.c.h.b16 %v774
        %v859 = vunpack.c.l.b16 %v775
        %v860 = vunpack.c.l.b16 %v776
        %v861 = vunpack.c.h.b16 %v776
        %v862 = vunpack.c.l.b16 %v777
        %v863 = vunpack.c.l.b16 %v778
        %v864 = vunpack.c.h.b16 %v778
        %v865 = vunpack.c.l.b16 %v779
        %v866 = vunpack.c.l.b16 %v780
        %v867 = vunpack.c.h.b16 %v780
        %v868 = vunpack.c.l.b16 %v781
        %v869 = vunpack.c.l.b16 %v782
        %v870 = vunpack.c.h.b16 %v782
        %v871 = vunpack.c.l.b16 %v783
        %v872 = vunpack.c.l.b16 %v784
        %v873 = vunpack.c.h.b16 %v784
        %v874 = vunpack.c.l.b16 %v785
        %v875 = vunpack.c.l.b16 %v786
        %v876 = vunpack.c.h.b16 %v786
        %v877 = vunpack.c.l.b16 %v787
        %v878 = vunpack.c.l.b16 %v788
        %v879 = vunpack.c.h.b16 %v788
        %v880 = vunpack.c.l.b16 %v789
        %v881 = vunpack.c.l.b16 %v790
        %v882 = vunpack.c.h.b16 %v790
        %v883 = vunpack.c.l.b16 %v791
        %v884 = vunpack.c.l.b16 %v792
        %v885 = vunpack.c.h.b16 %v792
        %v886 = vunpack.c.l.b16 %v793
        %v887 = vunpack.c.l.b16 %v794
        %v888 = vunpack.c.h.b16 %v794
        %v889 = vunpack.c.l.b16 %v795
        %v890 = vunpack.c.l.b16 %v796
        %v891 = vunpack.c.h.b16 %v796
        %v892 = vunpack.c.l.b16 %v797
        %v893 = vunpack.c.l.b16 %v798
        %v894 = vunpack.c.h.b16 %v798
        %v895 = vunpack.c.l.b16 %v799
        %v896 = vunpack.c.l.b16 %v800
        %v897 = vunpack.c.h.b16 %v800
        %v898 = vunpack.c.l.b16 %v801
        %v899 = vpack.c.b16 %v854, %v851
        %v900 = vpack.c.b16 %v855, %v852
        %v901 = vpack.c.b16 %v856, %v853
        %v902 = vpack.c.b16 %v860, %v857
        %v903 = vpack.c.b16 %v861, %v858
        %v904 = vpack.c.b16 %v862, %v859
        %v905 = vpack.c.b16 %v866, %v863
        %v906 = vpack.c.b16 %v867, %v864
        %v907 = vpack.c.b16 %v868, %v865
        %v908 = vpack.c.b16 %v872, %v869
        %v909 = vpack.c.b16 %v873, %v870
        %v910 = vpack.c.b16 %v874, %v871
        %v911 = vpack.c.b16 %v878, %v875
        %v912 = vpack.c.b16 %v879, %v876
        %v913 = vpack.c.b16 %v880, %v877
        %v914 = vpack.c.b16 %v884, %v881
        %v915 = vpack.c.b16 %v885, %v882
        %v916 = vpack.c.b16 %v886, %v883
        %v917 = vpack.c.b16 %v890, %v887
        %v918 = vpack.c.b16 %v891, %v888
        %v919 = vpack.c.b16 %v892, %v889
        %v920 = vpack.c.b16 %v896, %v893
        %v921 = vpack.c.b16 %v897, %v894
        %v922 = vpack.c.b16 %v898, %v895
        %947 = vmatprep.subr.bf16.mxu0 %v900
        %948 = vmatpush1.bf16.msra.mxu0 %v899
        %949 = vmatprep.subr.bf16.mxu0 %v903
        %950 = vmatpush1.bf16.msra.mxu0 %v902
        %951 = vmatprep.subr.bf16.mxu0 %v906
        %952 = vmatpush1.bf16.msra.mxu0 %v905
        %953 = vmatprep.subr.bf16.mxu0 %v909
        %954 = vmatpush1.bf16.msra.mxu0 %v908
        %955 = vmatprep.subr.bf16.mxu0 %v912
        %956 = vmatpush1.bf16.msra.mxu0 %v911
        %957 = vmatprep.subr.bf16.mxu0 %v915
        %958 = vmatpush1.bf16.msra.mxu0 %v914
        %959 = vmatprep.subr.bf16.mxu0 %v918
        %960 = vmatpush1.bf16.msra.mxu0 %v917
        %961 = vmatprep.subr.bf16.mxu0 %v921
        %962 = vmatpush1.bf16.msra.mxu0 %v920
        %963 = vmatprep.subr.bf16.mxu0 0
        %964 = vmatpush1.bf16.msra.mxu0 0
        %965 = vmatprep.subr.bf16.mxu0 0
        %966 = vmatpush1.bf16.msra.mxu0 0
        %967 = vmatprep.subr.bf16.mxu0 0
        %968 = vmatpush1.bf16.msra.mxu0 0
        %969 = vmatprep.subr.bf16.mxu0 0
        %970 = vmatpush1.bf16.msra.mxu0 0
        %971 = vmatprep.subr.bf16.mxu0 0
        %972 = vmatpush1.bf16.msra.mxu0 0
        %973 = vmatprep.subr.bf16.mxu0 0
        %974 = vmatpush1.bf16.msra.mxu0 0
        %975 = vmatprep.subr.bf16.mxu0 0
        %976 = vmatpush1.bf16.msra.mxu0 0
        %977 = vmatprep.subr.bf16.mxu0 0
        %978 = vmatpush1.bf16.msra.mxu0 0
        %979 = vmatprep.mubr.bf16.mxu0 0
        %980 = vmatmul.mubr.bf16.gmra.mrb[0].mxu0 %v769
        %v981 = vpop.f32.mrb[0].mxu0
        %v982 = vadd.f32 %v807, %v981
        %v983 = vpop.f32.mrb[0].mxu0
        %v984 = vadd.f32 %v811, %v983
        %v985 = vpop.f32.mrb[0].mxu0
        %v986 = vadd.f32 %v807, %v985
        %v987 = vpop.f32.mrb[0].mxu0
        %v988 = vadd.f32 %v811, %v987
        %989 = vdwg.mxu0
        %990 = vmatprep.subr.bf16.mxu0 0
        %991 = vmatpush1.bf16.msra.mxu0 %v901
        %992 = vmatprep.subr.bf16.mxu0 0
        %993 = vmatpush1.bf16.msra.mxu0 %v904
        %994 = vmatprep.subr.bf16.mxu0 0
        %995 = vmatpush1.bf16.msra.mxu0 %v907
        %996 = vmatprep.subr.bf16.mxu0 0
        %997 = vmatpush1.bf16.msra.mxu0 %v910
        %998 = vmatprep.subr.bf16.mxu0 0
        %999 = vmatpush1.bf16.msra.mxu0 %v913
        %1000 = vmatprep.subr.bf16.mxu0 0
        %1001 = vmatpush1.bf16.msra.mxu0 %v916
        %1002 = vmatprep.subr.bf16.mxu0 0
        %1003 = vmatpush1.bf16.msra.mxu0 %v919
        %1004 = vmatprep.subr.bf16.mxu0 0
        %1005 = vmatpush1.bf16.msra.mxu0 %v922
        %1006 = vmatprep.subr.bf16.mxu0 0
        %1007 = vmatpush1.bf16.msra.mxu0 0
        %1008 = vmatprep.subr.bf16.mxu0 0
        %1009 = vmatpush1.bf16.msra.mxu0 0
        %1010 = vmatprep.subr.bf16.mxu0 0
        %1011 = vmatpush1.bf16.msra.mxu0 0
        %1012 = vmatprep.subr.bf16.mxu0 0
        %1013 = vmatpush1.bf16.msra.mxu0 0
        %1014 = vmatprep.subr.bf16.mxu0 0
        %1015 = vmatpush1.bf16.msra.mxu0 0
        %1016 = vmatprep.subr.bf16.mxu0 0
        %1017 = vmatpush1.bf16.msra.mxu0 0
        %1018 = vmatprep.subr.bf16.mxu0 0
        %1019 = vmatpush1.bf16.msra.mxu0 0
        %1020 = vmatprep.subr.bf16.mxu0 0
        %1021 = vmatpush1.bf16.msra.mxu0 0
        %1022 = vmatprep.mubr.bf16.mxu0 0
        %1023 = vmatmul.mubr.bf16.gmra.mrb[0].mxu0 %v769
        %v1024 = vpop.f32.mrb[0].mxu0
        %v1025 = vadd.f32 %v815, %v1024
        %v1026 = vpop.f32.mrb[0].mxu0
        %v1027 = vpop.f32.mrb[0].mxu0
        %v1028 = vadd.f32 %v815, %v1027
        %v1029 = vpop.f32.mrb[0].mxu0
        %1030 = vdwg.mxu0
        %1032 = vrot.lane.b32.xlu0 %v982, 96
        %v1033 = vpop.permute.xlu0 %1032
        %1035 = vrot.lane.b32.xlu0 %v982, 64
        %v1036 = vpop.permute.xlu0 %1035
        %1038 = vrot.lane.b32.xlu0 %v982, 32
        %v1039 = vpop.permute.xlu0 %1038
        %1042 = vrot.lane.b32.xlu0 %v986, 96
        %v1043 = vpop.permute.xlu0 %1042
        %1045 = vrot.lane.b32.xlu0 %v986, 64
        %v1046 = vpop.permute.xlu0 %1045
        %1048 = vrot.lane.b32.xlu0 %v986, 32
        %v1049 = vpop.permute.xlu0 %1048
        %v1051 = vpack.c.bf16 %v982, %v982
        %v1052 = vpack.c.bf16 %v1033, %v1033
        %v1053 = vpack.c.bf16 %v1036, %v1036
        %v1054 = vpack.c.bf16 %v1039, %v1039
        %v1055 = vpack.c.bf16 %v986, %v986
        %v1056 = vpack.c.bf16 %v1043, %v1043
        %v1057 = vpack.c.bf16 %v1046, %v1046
        %v1058 = vpack.c.bf16 %v1049, %v1049
        %1060 = vrot.lane.b32.xlu0 %v984, 96
        %v1061 = vpop.permute.xlu0 %1060
        %1063 = vrot.lane.b32.xlu0 %v984, 64
        %v1064 = vpop.permute.xlu0 %1063
        %1066 = vrot.lane.b32.xlu0 %v984, 32
        %v1067 = vpop.permute.xlu0 %1066
        %1070 = vrot.lane.b32.xlu0 %v988, 96
        %v1071 = vpop.permute.xlu0 %1070
        %1073 = vrot.lane.b32.xlu0 %v988, 64
        %v1074 = vpop.permute.xlu0 %1073
        %1076 = vrot.lane.b32.xlu0 %v988, 32
        %v1077 = vpop.permute.xlu0 %1076
        %v1079 = vpack.c.bf16 %v984, %v984
        %v1080 = vpack.c.bf16 %v1061, %v1061
        %v1081 = vpack.c.bf16 %v1064, %v1064
        %v1082 = vpack.c.bf16 %v1067, %v1067
        %v1083 = vpack.c.bf16 %v988, %v988
        %v1084 = vpack.c.bf16 %v1071, %v1071
        %v1085 = vpack.c.bf16 %v1074, %v1074
        %v1086 = vpack.c.bf16 %v1077, %v1077
        %1088 = vrot.lane.b32.xlu0 %v1025, 96
        %v1089 = vpop.permute.xlu0 %1088
        %1091 = vrot.lane.b32.xlu0 %v1025, 64
        %v1092 = vpop.permute.xlu0 %1091
        %1094 = vrot.lane.b32.xlu0 %v1025, 32
        %v1095 = vpop.permute.xlu0 %1094
        %1098 = vrot.lane.b32.xlu0 %v1028, 96
        %v1099 = vpop.permute.xlu0 %1098
        %1101 = vrot.lane.b32.xlu0 %v1028, 64
        %v1102 = vpop.permute.xlu0 %1101
        %1104 = vrot.lane.b32.xlu0 %v1028, 32
        %v1105 = vpop.permute.xlu0 %1104
        %v1107 = vpack.c.bf16 %v1025, %v1025
        %v1108 = vpack.c.bf16 %v1089, %v1089
        %v1109 = vpack.c.bf16 %v1092, %v1092
        %v1110 = vpack.c.bf16 %v1095, %v1095
        %v1111 = vpack.c.bf16 %v1028, %v1028
        %v1112 = vpack.c.bf16 %v1099, %v1099
        %v1113 = vpack.c.bf16 %v1102, %v1102
        %v1114 = vpack.c.bf16 %v1105, %v1105
        %vm1115 = vcmask 261120
        %v1117 = vsel %vm1115, %v1051, 0
        %v1120 = vsel %vm1115, %v1079, 0
        %1122 = vmatprep.subr.bf16.mxu0 0
        %1123 = vmatpush1.bf16.xpose.msra.mxu0 %v1120
        %1124 = vmatprep.subr.bf16.mxu0 0
        %1125 = vmatpush1.bf16.xpose.msra.mxu0 0
        %1126 = vmatprep.subr.bf16.mxu0 0
        %1127 = vmatpush1.bf16.xpose.msra.mxu0 0
        %1128 = vmatprep.subr.bf16.mxu0 0
        %1129 = vmatpush1.bf16.xpose.msra.mxu0 0
        %1130 = vmatprep.subr.bf16.mxu0 0
        %1131 = vmatpush1.bf16.xpose.msra.mxu0 0
        %1132 = vmatprep.subr.bf16.mxu0 0
        %1133 = vmatpush1.bf16.xpose.msra.mxu0 0
        %1134 = vmatprep.subr.bf16.mxu0 0
        %1135 = vmatpush1.bf16.xpose.msra.mxu0 0
        %1136 = vmatprep.subr.bf16.mxu0 0
        %1137 = vmatpush1.bf16.xpose.msra.mxu0 0
        %1138 = vmatprep.subr.bf16.mxu0 0
        %1139 = vmatpush1.bf16.xpose.msra.mxu0 0
        %1140 = vmatprep.subr.bf16.mxu0 0
        %1141 = vmatpush1.bf16.xpose.msra.mxu0 0
        %1142 = vmatprep.subr.bf16.mxu0 0
        %1143 = vmatpush1.bf16.xpose.msra.mxu0 0
        %1144 = vmatprep.subr.bf16.mxu0 0
        %1145 = vmatpush1.bf16.xpose.msra.mxu0 0
        %1146 = vmatprep.subr.bf16.mxu0 0
        %1147 = vmatpush1.bf16.xpose.msra.mxu0 0
        %1148 = vmatprep.subr.bf16.mxu0 0
        %1149 = vmatpush1.bf16.xpose.msra.mxu0 0
        %1150 = vmatprep.subr.bf16.mxu0 0
        %1151 = vmatpush1.bf16.xpose.msra.mxu0 0
        %1152 = vmatprep.subr.bf16.mxu0 0
        %1153 = vmatpush1.bf16.xpose.msra.mxu0 0
        %1154 = vmatprep.mubr.bf16.mxu0 0
        %1155 = vmatmul.mubr.bf16.gmra.mrb[0].mxu0 %v1117
        %v1156 = vpop.f32.mrb[0].mxu0
        %v1157 = vadd.f32 0.0, %v1156
        %v1158 = vpop.f32.mrb[0].mxu0
        %v1159 = vpop.f32.mrb[0].mxu0
        %v1160 = vpop.f32.mrb[0].mxu0
        %1161 = vdwg.mxu0
        %v1163 = vsel %vm1115, %v1052, 0
        %v1166 = vsel %vm1115, %v1080, 0
        %1168 = vmatprep.subr.bf16.mxu0 0
        %1169 = vmatpush1.bf16.xpose.msra.mxu0 %v1166
        %1170 = vmatprep.subr.bf16.mxu0 0
        %1171 = vmatpush1.bf16.xpose.msra.mxu0 0
        %1172 = vmatprep.subr.bf16.mxu0 0
        %1173 = vmatpush1.bf16.xpose.msra.mxu0 0
        %1174 = vmatprep.subr.bf16.mxu0 0
        %1175 = vmatpush1.bf16.xpose.msra.mxu0 0
        %1176 = vmatprep.subr.bf16.mxu0 0
        %1177 = vmatpush1.bf16.xpose.msra.mxu0 0
        %1178 = vmatprep.subr.bf16.mxu0 0
        %1179 = vmatpush1.bf16.xpose.msra.mxu0 0
        %1180 = vmatprep.subr.bf16.mxu0 0
        %1181 = vmatpush1.bf16.xpose.msra.mxu0 0
        %1182 = vmatprep.subr.bf16.mxu0 0
        %1183 = vmatpush1.bf16.xpose.msra.mxu0 0
        %1184 = vmatprep.subr.bf16.mxu0 0
        %1185 = vmatpush1.bf16.xpose.msra.mxu0 0
        %1186 = vmatprep.subr.bf16.mxu0 0
        %1187 = vmatpush1.bf16.xpose.msra.mxu0 0
        %1188 = vmatprep.subr.bf16.mxu0 0
        %1189 = vmatpush1.bf16.xpose.msra.mxu0 0
        %1190 = vmatprep.subr.bf16.mxu0 0
        %1191 = vmatpush1.bf16.xpose.msra.mxu0 0
        %1192 = vmatprep.subr.bf16.mxu0 0
        %1193 = vmatpush1.bf16.xpose.msra.mxu0 0
        %1194 = vmatprep.subr.bf16.mxu0 0
        %1195 = vmatpush1.bf16.xpose.msra.mxu0 0
        %1196 = vmatprep.subr.bf16.mxu0 0
        %1197 = vmatpush1.bf16.xpose.msra.mxu0 0
        %1198 = vmatprep.subr.bf16.mxu0 0
        %1199 = vmatpush1.bf16.xpose.msra.mxu0 0
        %1200 = vmatprep.mubr.bf16.mxu0 0
        %1201 = vmatmul.mubr.bf16.gmra.mrb[0].mxu0 %v1163
        %v1202 = vpop.f32.mrb[0].mxu0
        %v1203 = vadd.f32 0.0, %v1202
        %v1204 = vpop.f32.mrb[0].mxu0
        %v1205 = vpop.f32.mrb[0].mxu0
        %v1206 = vpop.f32.mrb[0].mxu0
        %1207 = vdwg.mxu0
        %v1209 = vsel %vm1115, %v1053, 0
        %v1212 = vsel %vm1115, %v1081, 0
        %1214 = vmatprep.subr.bf16.mxu0 0
        %1215 = vmatpush1.bf16.xpose.msra.mxu0 %v1212
        %1216 = vmatprep.subr.bf16.mxu0 0
        %1217 = vmatpush1.bf16.xpose.msra.mxu0 0
        %1218 = vmatprep.subr.bf16.mxu0 0
        %1219 = vmatpush1.bf16.xpose.msra.mxu0 0
        %1220 = vmatprep.subr.bf16.mxu0 0
        %1221 = vmatpush1.bf16.xpose.msra.mxu0 0
        %1222 = vmatprep.subr.bf16.mxu0 0
        %1223 = vmatpush1.bf16.xpose.msra.mxu0 0
        %1224 = vmatprep.subr.bf16.mxu0 0
        %1225 = vmatpush1.bf16.xpose.msra.mxu0 0
        %1226 = vmatprep.subr.bf16.mxu0 0
        %1227 = vmatpush1.bf16.xpose.msra.mxu0 0
        %1228 = vmatprep.subr.bf16.mxu0 0
        %1229 = vmatpush1.bf16.xpose.msra.mxu0 0
        %1230 = vmatprep.subr.bf16.mxu0 0
        %1231 = vmatpush1.bf16.xpose.msra.mxu0 0
        %1232 = vmatprep.subr.bf16.mxu0 0
        %1233 = vmatpush1.bf16.xpose.msra.mxu0 0
        %1234 = vmatprep.subr.bf16.mxu0 0
        %1235 = vmatpush1.bf16.xpose.msra.mxu0 0
        %1236 = vmatprep.subr.bf16.mxu0 0
        %1237 = vmatpush1.bf16.xpose.msra.mxu0 0
        %1238 = vmatprep.subr.bf16.mxu0 0
        %1239 = vmatpush1.bf16.xpose.msra.mxu0 0
        %1240 = vmatprep.subr.bf16.mxu0 0
        %1241 = vmatpush1.bf16.xpose.msra.mxu0 0
        %1242 = vmatprep.subr.bf16.mxu0 0
        %1243 = vmatpush1.bf16.xpose.msra.mxu0 0
        %1244 = vmatprep.subr.bf16.mxu0 0
        %1245 = vmatpush1.bf16.xpose.msra.mxu0 0
        %1246 = vmatprep.mubr.bf16.mxu0 0
        %1247 = vmatmul.mubr.bf16.gmra.mrb[0].mxu0 %v1209
        %v1248 = vpop.f32.mrb[0].mxu0
        %v1249 = vadd.f32 0.0, %v1248
        %v1250 = vpop.f32.mrb[0].mxu0
        %v1251 = vpop.f32.mrb[0].mxu0
        %v1252 = vpop.f32.mrb[0].mxu0
        %1253 = vdwg.mxu0
        %v1255 = vsel %vm1115, %v1054, 0
        %v1258 = vsel %vm1115, %v1082, 0
        %1260 = vmatprep.subr.bf16.mxu0 0
        %1261 = vmatpush1.bf16.xpose.msra.mxu0 %v1258
        %1262 = vmatprep.subr.bf16.mxu0 0
        %1263 = vmatpush1.bf16.xpose.msra.mxu0 0
        %1264 = vmatprep.subr.bf16.mxu0 0
        %1265 = vmatpush1.bf16.xpose.msra.mxu0 0
        %1266 = vmatprep.subr.bf16.mxu0 0
        %1267 = vmatpush1.bf16.xpose.msra.mxu0 0
        %1268 = vmatprep.subr.bf16.mxu0 0
        %1269 = vmatpush1.bf16.xpose.msra.mxu0 0
        %1270 = vmatprep.subr.bf16.mxu0 0
        %1271 = vmatpush1.bf16.xpose.msra.mxu0 0
        %1272 = vmatprep.subr.bf16.mxu0 0
        %1273 = vmatpush1.bf16.xpose.msra.mxu0 0
        %1274 = vmatprep.subr.bf16.mxu0 0
        %1275 = vmatpush1.bf16.xpose.msra.mxu0 0
        %1276 = vmatprep.subr.bf16.mxu0 0
        %1277 = vmatpush1.bf16.xpose.msra.mxu0 0
        %1278 = vmatprep.subr.bf16.mxu0 0
        %1279 = vmatpush1.bf16.xpose.msra.mxu0 0
        %1280 = vmatprep.subr.bf16.mxu0 0
        %1281 = vmatpush1.bf16.xpose.msra.mxu0 0
        %1282 = vmatprep.subr.bf16.mxu0 0
        %1283 = vmatpush1.bf16.xpose.msra.mxu0 0
        %1284 = vmatprep.subr.bf16.mxu0 0
        %1285 = vmatpush1.bf16.xpose.msra.mxu0 0
        %1286 = vmatprep.subr.bf16.mxu0 0
        %1287 = vmatpush1.bf16.xpose.msra.mxu0 0
        %1288 = vmatprep.subr.bf16.mxu0 0
        %1289 = vmatpush1.bf16.xpose.msra.mxu0 0
        %1290 = vmatprep.subr.bf16.mxu0 0
        %1291 = vmatpush1.bf16.xpose.msra.mxu0 0
        %1292 = vmatprep.mubr.bf16.mxu0 0
        %1293 = vmatmul.mubr.bf16.gmra.mrb[0].mxu0 %v1255
        %v1294 = vpop.f32.mrb[0].mxu0
        %v1295 = vadd.f32 0.0, %v1294
        %v1296 = vpop.f32.mrb[0].mxu0
        %v1297 = vpop.f32.mrb[0].mxu0
        %v1298 = vpop.f32.mrb[0].mxu0
        %1299 = vdwg.mxu0
        %v1301 = vsel %vm1115, %v1055, 0
        %v1304 = vsel %vm1115, %v1083, 0
        %1306 = vmatprep.subr.bf16.mxu0 0
        %1307 = vmatpush1.bf16.xpose.msra.mxu0 %v1304
        %1308 = vmatprep.subr.bf16.mxu0 0
        %1309 = vmatpush1.bf16.xpose.msra.mxu0 0
        %1310 = vmatprep.subr.bf16.mxu0 0
        %1311 = vmatpush1.bf16.xpose.msra.mxu0 0
        %1312 = vmatprep.subr.bf16.mxu0 0
        %1313 = vmatpush1.bf16.xpose.msra.mxu0 0
        %1314 = vmatprep.subr.bf16.mxu0 0
        %1315 = vmatpush1.bf16.xpose.msra.mxu0 0
        %1316 = vmatprep.subr.bf16.mxu0 0
        %1317 = vmatpush1.bf16.xpose.msra.mxu0 0
        %1318 = vmatprep.subr.bf16.mxu0 0
        %1319 = vmatpush1.bf16.xpose.msra.mxu0 0
        %1320 = vmatprep.subr.bf16.mxu0 0
        %1321 = vmatpush1.bf16.xpose.msra.mxu0 0
        %1322 = vmatprep.subr.bf16.mxu0 0
        %1323 = vmatpush1.bf16.xpose.msra.mxu0 0
        %1324 = vmatprep.subr.bf16.mxu0 0
        %1325 = vmatpush1.bf16.xpose.msra.mxu0 0
        %1326 = vmatprep.subr.bf16.mxu0 0
        %1327 = vmatpush1.bf16.xpose.msra.mxu0 0
        %1328 = vmatprep.subr.bf16.mxu0 0
        %1329 = vmatpush1.bf16.xpose.msra.mxu0 0
        %1330 = vmatprep.subr.bf16.mxu0 0
        %1331 = vmatpush1.bf16.xpose.msra.mxu0 0
        %1332 = vmatprep.subr.bf16.mxu0 0
        %1333 = vmatpush1.bf16.xpose.msra.mxu0 0
        %1334 = vmatprep.subr.bf16.mxu0 0
        %1335 = vmatpush1.bf16.xpose.msra.mxu0 0
        %1336 = vmatprep.subr.bf16.mxu0 0
        %1337 = vmatpush1.bf16.xpose.msra.mxu0 0
        %1338 = vmatprep.mubr.bf16.mxu0 0
        %1339 = vmatmul.mubr.bf16.gmra.mrb[0].mxu0 %v1301
        %v1340 = vpop.f32.mrb[0].mxu0
        %v1341 = vadd.f32 0.0, %v1340
        %v1342 = vpop.f32.mrb[0].mxu0
        %v1343 = vpop.f32.mrb[0].mxu0
        %v1344 = vpop.f32.mrb[0].mxu0
        %1345 = vdwg.mxu0
        %v1347 = vsel %vm1115, %v1056, 0
        %v1350 = vsel %vm1115, %v1084, 0
        %1352 = vmatprep.subr.bf16.mxu0 0
        %1353 = vmatpush1.bf16.xpose.msra.mxu0 %v1350
        %1354 = vmatprep.subr.bf16.mxu0 0
        %1355 = vmatpush1.bf16.xpose.msra.mxu0 0
        %1356 = vmatprep.subr.bf16.mxu0 0
        %1357 = vmatpush1.bf16.xpose.msra.mxu0 0
        %1358 = vmatprep.subr.bf16.mxu0 0
        %1359 = vmatpush1.bf16.xpose.msra.mxu0 0
        %1360 = vmatprep.subr.bf16.mxu0 0
        %1361 = vmatpush1.bf16.xpose.msra.mxu0 0
        %1362 = vmatprep.subr.bf16.mxu0 0
        %1363 = vmatpush1.bf16.xpose.msra.mxu0 0
        %1364 = vmatprep.subr.bf16.mxu0 0
        %1365 = vmatpush1.bf16.xpose.msra.mxu0 0
        %1366 = vmatprep.subr.bf16.mxu0 0
        %1367 = vmatpush1.bf16.xpose.msra.mxu0 0
        %1368 = vmatprep.subr.bf16.mxu0 0
        %1369 = vmatpush1.bf16.xpose.msra.mxu0 0
        %1370 = vmatprep.subr.bf16.mxu0 0
        %1371 = vmatpush1.bf16.xpose.msra.mxu0 0
        %1372 = vmatprep.subr.bf16.mxu0 0
        %1373 = vmatpush1.bf16.xpose.msra.mxu0 0
        %1374 = vmatprep.subr.bf16.mxu0 0
        %1375 = vmatpush1.bf16.xpose.msra.mxu0 0
        %1376 = vmatprep.subr.bf16.mxu0 0
        %1377 = vmatpush1.bf16.xpose.msra.mxu0 0
        %1378 = vmatprep.subr.bf16.mxu0 0
        %1379 = vmatpush1.bf16.xpose.msra.mxu0 0
        %1380 = vmatprep.subr.bf16.mxu0 0
        %1381 = vmatpush1.bf16.xpose.msra.mxu0 0
        %1382 = vmatprep.subr.bf16.mxu0 0
        %1383 = vmatpush1.bf16.xpose.msra.mxu0 0
        %1384 = vmatprep.mubr.bf16.mxu0 0
        %1385 = vmatmul.mubr.bf16.gmra.mrb[0].mxu0 %v1347
        %v1386 = vpop.f32.mrb[0].mxu0
        %v1387 = vadd.f32 0.0, %v1386
        %v1388 = vpop.f32.mrb[0].mxu0
        %v1389 = vpop.f32.mrb[0].mxu0
        %v1390 = vpop.f32.mrb[0].mxu0
        %1391 = vdwg.mxu0
        %v1393 = vsel %vm1115, %v1057, 0
        %v1396 = vsel %vm1115, %v1085, 0
        %1398 = vmatprep.subr.bf16.mxu0 0
        %1399 = vmatpush1.bf16.xpose.msra.mxu0 %v1396
        %1400 = vmatprep.subr.bf16.mxu0 0
        %1401 = vmatpush1.bf16.xpose.msra.mxu0 0
        %1402 = vmatprep.subr.bf16.mxu0 0
        %1403 = vmatpush1.bf16.xpose.msra.mxu0 0
        %1404 = vmatprep.subr.bf16.mxu0 0
        %1405 = vmatpush1.bf16.xpose.msra.mxu0 0
        %1406 = vmatprep.subr.bf16.mxu0 0
        %1407 = vmatpush1.bf16.xpose.msra.mxu0 0
        %1408 = vmatprep.subr.bf16.mxu0 0
        %1409 = vmatpush1.bf16.xpose.msra.mxu0 0
        %1410 = vmatprep.subr.bf16.mxu0 0
        %1411 = vmatpush1.bf16.xpose.msra.mxu0 0
        %1412 = vmatprep.subr.bf16.mxu0 0
        %1413 = vmatpush1.bf16.xpose.msra.mxu0 0
        %1414 = vmatprep.subr.bf16.mxu0 0
        %1415 = vmatpush1.bf16.xpose.msra.mxu0 0
        %1416 = vmatprep.subr.bf16.mxu0 0
        %1417 = vmatpush1.bf16.xpose.msra.mxu0 0
        %1418 = vmatprep.subr.bf16.mxu0 0
        %1419 = vmatpush1.bf16.xpose.msra.mxu0 0
        %1420 = vmatprep.subr.bf16.mxu0 0
        %1421 = vmatpush1.bf16.xpose.msra.mxu0 0
        %1422 = vmatprep.subr.bf16.mxu0 0
        %1423 = vmatpush1.bf16.xpose.msra.mxu0 0
        %1424 = vmatprep.subr.bf16.mxu0 0
        %1425 = vmatpush1.bf16.xpose.msra.mxu0 0
        %1426 = vmatprep.subr.bf16.mxu0 0
        %1427 = vmatpush1.bf16.xpose.msra.mxu0 0
        %1428 = vmatprep.subr.bf16.mxu0 0
        %1429 = vmatpush1.bf16.xpose.msra.mxu0 0
        %1430 = vmatprep.mubr.bf16.mxu0 0
        %1431 = vmatmul.mubr.bf16.gmra.mrb[0].mxu0 %v1393
        %v1432 = vpop.f32.mrb[0].mxu0
        %v1433 = vadd.f32 0.0, %v1432
        %v1434 = vpop.f32.mrb[0].mxu0
        %v1435 = vpop.f32.mrb[0].mxu0
        %v1436 = vpop.f32.mrb[0].mxu0
        %1437 = vdwg.mxu0
        %v1439 = vsel %vm1115, %v1058, 0
        %v1442 = vsel %vm1115, %v1086, 0
        %1444 = vmatprep.subr.bf16.mxu0 0
        %1445 = vmatpush1.bf16.xpose.msra.mxu0 %v1442
        %1446 = vmatprep.subr.bf16.mxu0 0
        %1447 = vmatpush1.bf16.xpose.msra.mxu0 0
        %1448 = vmatprep.subr.bf16.mxu0 0
        %1449 = vmatpush1.bf16.xpose.msra.mxu0 0
        %1450 = vmatprep.subr.bf16.mxu0 0
        %1451 = vmatpush1.bf16.xpose.msra.mxu0 0
        %1452 = vmatprep.subr.bf16.mxu0 0
        %1453 = vmatpush1.bf16.xpose.msra.mxu0 0
        %1454 = vmatprep.subr.bf16.mxu0 0
        %1455 = vmatpush1.bf16.xpose.msra.mxu0 0
        %1456 = vmatprep.subr.bf16.mxu0 0
        %1457 = vmatpush1.bf16.xpose.msra.mxu0 0
        %1458 = vmatprep.subr.bf16.mxu0 0
        %1459 = vmatpush1.bf16.xpose.msra.mxu0 0
        %1460 = vmatprep.subr.bf16.mxu0 0
        %1461 = vmatpush1.bf16.xpose.msra.mxu0 0
        %1462 = vmatprep.subr.bf16.mxu0 0
        %1463 = vmatpush1.bf16.xpose.msra.mxu0 0
        %1464 = vmatprep.subr.bf16.mxu0 0
        %1465 = vmatpush1.bf16.xpose.msra.mxu0 0
        %1466 = vmatprep.subr.bf16.mxu0 0
        %1467 = vmatpush1.bf16.xpose.msra.mxu0 0
        %1468 = vmatprep.subr.bf16.mxu0 0
        %1469 = vmatpush1.bf16.xpose.msra.mxu0 0
        %1470 = vmatprep.subr.bf16.mxu0 0
        %1471 = vmatpush1.bf16.xpose.msra.mxu0 0
        %1472 = vmatprep.subr.bf16.mxu0 0
        %1473 = vmatpush1.bf16.xpose.msra.mxu0 0
        %1474 = vmatprep.subr.bf16.mxu0 0
        %1475 = vmatpush1.bf16.xpose.msra.mxu0 0
        %1476 = vmatprep.mubr.bf16.mxu0 0
        %1477 = vmatmul.mubr.bf16.gmra.mrb[0].mxu0 %v1439
        %v1478 = vpop.f32.mrb[0].mxu0
        %v1479 = vadd.f32 0.0, %v1478
        %v1480 = vpop.f32.mrb[0].mxu0
        %v1481 = vpop.f32.mrb[0].mxu0
        %v1482 = vpop.f32.mrb[0].mxu0
        %1483 = vdwg.mxu0
        %vm1484 = vcmask 64512
        %v1485 = vsel %vm1484, %v1157, -inf
        %1486 = vmax.xlane.f32.xlu0 %v1485
        %v1487 = vpop.xlane.xlu0 %1486
        %v1488 = vsel %vm1484, %v1203, -inf
        %1489 = vmax.xlane.f32.xlu0 %v1488
        %v1490 = vpop.xlane.xlu0 %1489
        %v1491 = vsel %vm1484, %v1249, -inf
        %1492 = vmax.xlane.f32.xlu0 %v1491
        %v1493 = vpop.xlane.xlu0 %1492
        %v1494 = vsel %vm1484, %v1295, -inf
        %1495 = vmax.xlane.f32.xlu0 %v1494
        %v1496 = vpop.xlane.xlu0 %1495
        %v1497 = vsel %vm1484, %v1341, -inf
        %1498 = vmax.xlane.f32.xlu0 %v1497
        %v1499 = vpop.xlane.xlu0 %1498
        %v1500 = vsel %vm1484, %v1387, -inf
        %1501 = vmax.xlane.f32.xlu0 %v1500
        %v1502 = vpop.xlane.xlu0 %1501
        %v1503 = vsel %vm1484, %v1433, -inf
        %1504 = vmax.xlane.f32.xlu0 %v1503
        %v1505 = vpop.xlane.xlu0 %1504
        %v1506 = vsel %vm1484, %v1479, -inf
        %1507 = vmax.xlane.f32.xlu0 %v1506
        %v1508 = vpop.xlane.xlu0 %1507
        %v1509 = vsub.f32 %v1157, %v1487
        %v1510 = vsub.f32 %v1203, %v1490
        %v1511 = vsub.f32 %v1249, %v1493
        %v1512 = vsub.f32 %v1295, %v1496
        %v1513 = vsub.f32 %v1341, %v1499
        %v1514 = vsub.f32 %v1387, %v1502
        %v1515 = vsub.f32 %v1433, %v1505
        %v1516 = vsub.f32 %v1479, %v1508
        %v1517 = vmul.f32 %v1509, 1.442695
        %v1518 = vpow.pop %v1517
        %v1519 = vmul.f32 %v1510, 1.442695
        %v1520 = vpow.pop %v1519
        %v1521 = vmul.f32 %v1511, 1.442695
        %v1522 = vpow.pop %v1521
        %v1523 = vmul.f32 %v1512, 1.442695
        %v1524 = vpow.pop %v1523
        %v1525 = vmul.f32 %v1513, 1.442695
        %v1526 = vpow.pop %v1525
        %v1527 = vmul.f32 %v1514, 1.442695
        %v1528 = vpow.pop %v1527
        %v1529 = vmul.f32 %v1515, 1.442695
        %v1530 = vpow.pop %v1529
        %v1531 = vmul.f32 %v1516, 1.442695
        %v1532 = vpow.pop %v1531
        %v1533 = vsel %vm1484, %v1518, 0.0
        %1534 = vadd.xlane.f32.xlu0 %v1533
        %v1535 = vpop.xlane.xlu0 %1534
        %v1536 = vsel %vm1484, %v1520, 0.0
        %1537 = vadd.xlane.f32.xlu0 %v1536
        %v1538 = vpop.xlane.xlu0 %1537
        %v1539 = vsel %vm1484, %v1522, 0.0
        %1540 = vadd.xlane.f32.xlu0 %v1539
        %v1541 = vpop.xlane.xlu0 %1540
        %v1542 = vsel %vm1484, %v1524, 0.0
        %1543 = vadd.xlane.f32.xlu0 %v1542
        %v1544 = vpop.xlane.xlu0 %1543
        %v1545 = vsel %vm1484, %v1526, 0.0
        %1546 = vadd.xlane.f32.xlu0 %v1545
        %v1547 = vpop.xlane.xlu0 %1546
        %v1548 = vsel %vm1484, %v1528, 0.0
        %1549 = vadd.xlane.f32.xlu0 %v1548
        %v1550 = vpop.xlane.xlu0 %1549
        %v1551 = vsel %vm1484, %v1530, 0.0
        %1552 = vadd.xlane.f32.xlu0 %v1551
        %v1553 = vpop.xlane.xlu0 %1552
        %v1554 = vsel %vm1484, %v1532, 0.0
        %1555 = vadd.xlane.f32.xlu0 %v1554
        %v1556 = vpop.xlane.xlu0 %1555
        %v1557 = vrcp.pop %v1535
        %v1558 = vrcp.pop %v1538
        %v1559 = vrcp.pop %v1541
        %v1560 = vrcp.pop %v1544
        %v1561 = vrcp.pop %v1547
        %v1562 = vrcp.pop %v1550
        %v1563 = vrcp.pop %v1553
        %v1564 = vrcp.pop %v1556
        %v1565 = vmul.f32 %v1518, %v1557
        %v1566 = vmul.f32 %v1520, %v1558
        %v1567 = vmul.f32 %v1522, %v1559
        %v1568 = vmul.f32 %v1524, %v1560
        %v1569 = vmul.f32 %v1526, %v1561
        %v1570 = vmul.f32 %v1528, %v1562
        %v1571 = vmul.f32 %v1530, %v1563
        %v1572 = vmul.f32 %v1532, %v1564
        %v1573 = vpack.c.bf16 %v1565, %v1565
        %v1574 = vpack.c.bf16 %v1566, %v1566
        %v1575 = vpack.c.bf16 %v1567, %v1567
        %v1576 = vpack.c.bf16 %v1568, %v1568
        %v1577 = vpack.c.bf16 %v1569, %v1569
        %v1578 = vpack.c.bf16 %v1570, %v1570
        %v1579 = vpack.c.bf16 %v1571, %v1571
        %v1580 = vpack.c.bf16 %v1572, %v1572
        %v1582 = vsel %vm1484, %v1573, 0
        %vm1584 = vcmask 1043456
        %v1586 = vsel %vm1584, %v1107, 0
        %1588 = vmatprep.subr.bf16.mxu0 0
        %1589 = vmatpush1.bf16.msra.mxu0 %v1586
        %1590 = vmatprep.subr.bf16.mxu0 0
        %1591 = vmatpush1.bf16.msra.mxu0 0
        %1592 = vmatprep.subr.bf16.mxu0 0
        %1593 = vmatpush1.bf16.msra.mxu0 0
        %1594 = vmatprep.subr.bf16.mxu0 0
        %1595 = vmatpush1.bf16.msra.mxu0 0
        %1596 = vmatprep.subr.bf16.mxu0 0
        %1597 = vmatpush1.bf16.msra.mxu0 0
        %1598 = vmatprep.subr.bf16.mxu0 0
        %1599 = vmatpush1.bf16.msra.mxu0 0
        %1600 = vmatprep.subr.bf16.mxu0 0
        %1601 = vmatpush1.bf16.msra.mxu0 0
        %1602 = vmatprep.subr.bf16.mxu0 0
        %1603 = vmatpush1.bf16.msra.mxu0 0
        %1604 = vmatprep.subr.bf16.mxu0 0
        %1605 = vmatpush1.bf16.msra.mxu0 0
        %1606 = vmatprep.subr.bf16.mxu0 0
        %1607 = vmatpush1.bf16.msra.mxu0 0
        %1608 = vmatprep.subr.bf16.mxu0 0
        %1609 = vmatpush1.bf16.msra.mxu0 0
        %1610 = vmatprep.subr.bf16.mxu0 0
        %1611 = vmatpush1.bf16.msra.mxu0 0
        %1612 = vmatprep.subr.bf16.mxu0 0
        %1613 = vmatpush1.bf16.msra.mxu0 0
        %1614 = vmatprep.subr.bf16.mxu0 0
        %1615 = vmatpush1.bf16.msra.mxu0 0
        %1616 = vmatprep.subr.bf16.mxu0 0
        %1617 = vmatpush1.bf16.msra.mxu0 0
        %1618 = vmatprep.subr.bf16.mxu0 0
        %1619 = vmatpush1.bf16.msra.mxu0 0
        %1620 = vmatprep.mubr.bf16.mxu0 0
        %1621 = vmatmul.mubr.bf16.gmra.mrb[0].mxu0 %v1582
        %v1622 = vpop.f32.mrb[0].mxu0
        %v1623 = vadd.f32 0.0, %v1622
        %v1624 = vpop.f32.mrb[0].mxu0
        %v1625 = vpop.f32.mrb[0].mxu0
        %v1626 = vpop.f32.mrb[0].mxu0
        %1627 = vdwg.mxu0
        %v1629 = vsel %vm1484, %v1574, 0
        %v1632 = vsel %vm1584, %v1108, 0
        %1634 = vmatprep.subr.bf16.mxu0 0
        %1635 = vmatpush1.bf16.msra.mxu0 %v1632
        %1636 = vmatprep.subr.bf16.mxu0 0
        %1637 = vmatpush1.bf16.msra.mxu0 0
        %1638 = vmatprep.subr.bf16.mxu0 0
        %1639 = vmatpush1.bf16.msra.mxu0 0
        %1640 = vmatprep.subr.bf16.mxu0 0
        %1641 = vmatpush1.bf16.msra.mxu0 0
        %1642 = vmatprep.subr.bf16.mxu0 0
        %1643 = vmatpush1.bf16.msra.mxu0 0
        %1644 = vmatprep.subr.bf16.mxu0 0
        %1645 = vmatpush1.bf16.msra.mxu0 0
        %1646 = vmatprep.subr.bf16.mxu0 0
        %1647 = vmatpush1.bf16.msra.mxu0 0
        %1648 = vmatprep.subr.bf16.mxu0 0
        %1649 = vmatpush1.bf16.msra.mxu0 0
        %1650 = vmatprep.subr.bf16.mxu0 0
        %1651 = vmatpush1.bf16.msra.mxu0 0
        %1652 = vmatprep.subr.bf16.mxu0 0
        %1653 = vmatpush1.bf16.msra.mxu0 0
        %1654 = vmatprep.subr.bf16.mxu0 0
        %1655 = vmatpush1.bf16.msra.mxu0 0
        %1656 = vmatprep.subr.bf16.mxu0 0
        %1657 = vmatpush1.bf16.msra.mxu0 0
        %1658 = vmatprep.subr.bf16.mxu0 0
        %1659 = vmatpush1.bf16.msra.mxu0 0
        %1660 = vmatprep.subr.bf16.mxu0 0
        %1661 = vmatpush1.bf16.msra.mxu0 0
        %1662 = vmatprep.subr.bf16.mxu0 0
        %1663 = vmatpush1.bf16.msra.mxu0 0
        %1664 = vmatprep.subr.bf16.mxu0 0
        %1665 = vmatpush1.bf16.msra.mxu0 0
        %1666 = vmatprep.mubr.bf16.mxu0 0
        %1667 = vmatmul.mubr.bf16.gmra.mrb[0].mxu0 %v1629
        %v1668 = vpop.f32.mrb[0].mxu0
        %v1669 = vadd.f32 0.0, %v1668
        %v1670 = vpop.f32.mrb[0].mxu0
        %v1671 = vpop.f32.mrb[0].mxu0
        %v1672 = vpop.f32.mrb[0].mxu0
        %1673 = vdwg.mxu0
        %v1675 = vsel %vm1484, %v1575, 0
        %v1678 = vsel %vm1584, %v1109, 0
        %1680 = vmatprep.subr.bf16.mxu0 0
        %1681 = vmatpush1.bf16.msra.mxu0 %v1678
        %1682 = vmatprep.subr.bf16.mxu0 0
        %1683 = vmatpush1.bf16.msra.mxu0 0
        %1684 = vmatprep.subr.bf16.mxu0 0
        %1685 = vmatpush1.bf16.msra.mxu0 0
        %1686 = vmatprep.subr.bf16.mxu0 0
        %1687 = vmatpush1.bf16.msra.mxu0 0
        %1688 = vmatprep.subr.bf16.mxu0 0
        %1689 = vmatpush1.bf16.msra.mxu0 0
        %1690 = vmatprep.subr.bf16.mxu0 0
        %1691 = vmatpush1.bf16.msra.mxu0 0
        %1692 = vmatprep.subr.bf16.mxu0 0
        %1693 = vmatpush1.bf16.msra.mxu0 0
        %1694 = vmatprep.subr.bf16.mxu0 0
        %1695 = vmatpush1.bf16.msra.mxu0 0
        %1696 = vmatprep.subr.bf16.mxu0 0
        %1697 = vmatpush1.bf16.msra.mxu0 0
        %1698 = vmatprep.subr.bf16.mxu0 0
        %1699 = vmatpush1.bf16.msra.mxu0 0
        %1700 = vmatprep.subr.bf16.mxu0 0
        %1701 = vmatpush1.bf16.msra.mxu0 0
        %1702 = vmatprep.subr.bf16.mxu0 0
        %1703 = vmatpush1.bf16.msra.mxu0 0
        %1704 = vmatprep.subr.bf16.mxu0 0
        %1705 = vmatpush1.bf16.msra.mxu0 0
        %1706 = vmatprep.subr.bf16.mxu0 0
        %1707 = vmatpush1.bf16.msra.mxu0 0
        %1708 = vmatprep.subr.bf16.mxu0 0
        %1709 = vmatpush1.bf16.msra.mxu0 0
        %1710 = vmatprep.subr.bf16.mxu0 0
        %1711 = vmatpush1.bf16.msra.mxu0 0
        %1712 = vmatprep.mubr.bf16.mxu0 0
        %1713 = vmatmul.mubr.bf16.gmra.mrb[0].mxu0 %v1675
        %v1714 = vpop.f32.mrb[0].mxu0
        %v1715 = vadd.f32 0.0, %v1714
        %v1716 = vpop.f32.mrb[0].mxu0
        %v1717 = vpop.f32.mrb[0].mxu0
        %v1718 = vpop.f32.mrb[0].mxu0
        %1719 = vdwg.mxu0
        %v1721 = vsel %vm1484, %v1576, 0
        %v1724 = vsel %vm1584, %v1110, 0
        %1726 = vmatprep.subr.bf16.mxu0 0
        %1727 = vmatpush1.bf16.msra.mxu0 %v1724
        %1728 = vmatprep.subr.bf16.mxu0 0
        %1729 = vmatpush1.bf16.msra.mxu0 0
        %1730 = vmatprep.subr.bf16.mxu0 0
        %1731 = vmatpush1.bf16.msra.mxu0 0
        %1732 = vmatprep.subr.bf16.mxu0 0
        %1733 = vmatpush1.bf16.msra.mxu0 0
        %1734 = vmatprep.subr.bf16.mxu0 0
        %1735 = vmatpush1.bf16.msra.mxu0 0
        %1736 = vmatprep.subr.bf16.mxu0 0
        %1737 = vmatpush1.bf16.msra.mxu0 0
        %1738 = vmatprep.subr.bf16.mxu0 0
        %1739 = vmatpush1.bf16.msra.mxu0 0
        %1740 = vmatprep.subr.bf16.mxu0 0
        %1741 = vmatpush1.bf16.msra.mxu0 0
        %1742 = vmatprep.subr.bf16.mxu0 0
        %1743 = vmatpush1.bf16.msra.mxu0 0
        %1744 = vmatprep.subr.bf16.mxu0 0
        %1745 = vmatpush1.bf16.msra.mxu0 0
        %1746 = vmatprep.subr.bf16.mxu0 0
        %1747 = vmatpush1.bf16.msra.mxu0 0
        %1748 = vmatprep.subr.bf16.mxu0 0
        %1749 = vmatpush1.bf16.msra.mxu0 0
        %1750 = vmatprep.subr.bf16.mxu0 0
        %1751 = vmatpush1.bf16.msra.mxu0 0
        %1752 = vmatprep.subr.bf16.mxu0 0
        %1753 = vmatpush1.bf16.msra.mxu0 0
        %1754 = vmatprep.subr.bf16.mxu0 0
        %1755 = vmatpush1.bf16.msra.mxu0 0
        %1756 = vmatprep.subr.bf16.mxu0 0
        %1757 = vmatpush1.bf16.msra.mxu0 0
        %1758 = vmatprep.mubr.bf16.mxu0 0
        %1759 = vmatmul.mubr.bf16.gmra.mrb[0].mxu0 %v1721
        %v1760 = vpop.f32.mrb[0].mxu0
        %v1761 = vadd.f32 0.0, %v1760
        %v1762 = vpop.f32.mrb[0].mxu0
        %v1763 = vpop.f32.mrb[0].mxu0
        %v1764 = vpop.f32.mrb[0].mxu0
        %1765 = vdwg.mxu0
        %v1767 = vsel %vm1484, %v1577, 0
        %v1770 = vsel %vm1584, %v1111, 0
        %1772 = vmatprep.subr.bf16.mxu0 0
        %1773 = vmatpush1.bf16.msra.mxu0 %v1770
        %1774 = vmatprep.subr.bf16.mxu0 0
        %1775 = vmatpush1.bf16.msra.mxu0 0
        %1776 = vmatprep.subr.bf16.mxu0 0
        %1777 = vmatpush1.bf16.msra.mxu0 0
        %1778 = vmatprep.subr.bf16.mxu0 0
        %1779 = vmatpush1.bf16.msra.mxu0 0
        %1780 = vmatprep.subr.bf16.mxu0 0
        %1781 = vmatpush1.bf16.msra.mxu0 0
        %1782 = vmatprep.subr.bf16.mxu0 0
        %1783 = vmatpush1.bf16.msra.mxu0 0
        %1784 = vmatprep.subr.bf16.mxu0 0
        %1785 = vmatpush1.bf16.msra.mxu0 0
        %1786 = vmatprep.subr.bf16.mxu0 0
        %1787 = vmatpush1.bf16.msra.mxu0 0
        %1788 = vmatprep.subr.bf16.mxu0 0
        %1789 = vmatpush1.bf16.msra.mxu0 0
        %1790 = vmatprep.subr.bf16.mxu0 0
        %1791 = vmatpush1.bf16.msra.mxu0 0
        %1792 = vmatprep.subr.bf16.mxu0 0
        %1793 = vmatpush1.bf16.msra.mxu0 0
        %1794 = vmatprep.subr.bf16.mxu0 0
        %1795 = vmatpush1.bf16.msra.mxu0 0
        %1796 = vmatprep.subr.bf16.mxu0 0
        %1797 = vmatpush1.bf16.msra.mxu0 0
        %1798 = vmatprep.subr.bf16.mxu0 0
        %1799 = vmatpush1.bf16.msra.mxu0 0
        %1800 = vmatprep.subr.bf16.mxu0 0
        %1801 = vmatpush1.bf16.msra.mxu0 0
        %1802 = vmatprep.subr.bf16.mxu0 0
        %1803 = vmatpush1.bf16.msra.mxu0 0
        %1804 = vmatprep.mubr.bf16.mxu0 0
        %1805 = vmatmul.mubr.bf16.gmra.mrb[0].mxu0 %v1767
        %v1806 = vpop.f32.mrb[0].mxu0
        %v1807 = vadd.f32 0.0, %v1806
        %v1808 = vpop.f32.mrb[0].mxu0
        %v1809 = vpop.f32.mrb[0].mxu0
        %v1810 = vpop.f32.mrb[0].mxu0
        %1811 = vdwg.mxu0
        %v1813 = vsel %vm1484, %v1578, 0
        %v1816 = vsel %vm1584, %v1112, 0
        %1818 = vmatprep.subr.bf16.mxu0 0
        %1819 = vmatpush1.bf16.msra.mxu0 %v1816
        %1820 = vmatprep.subr.bf16.mxu0 0
        %1821 = vmatpush1.bf16.msra.mxu0 0
        %1822 = vmatprep.subr.bf16.mxu0 0
        %1823 = vmatpush1.bf16.msra.mxu0 0
        %1824 = vmatprep.subr.bf16.mxu0 0
        %1825 = vmatpush1.bf16.msra.mxu0 0
        %1826 = vmatprep.subr.bf16.mxu0 0
        %1827 = vmatpush1.bf16.msra.mxu0 0
        %1828 = vmatprep.subr.bf16.mxu0 0
        %1829 = vmatpush1.bf16.msra.mxu0 0
        %1830 = vmatprep.subr.bf16.mxu0 0
        %1831 = vmatpush1.bf16.msra.mxu0 0
        %1832 = vmatprep.subr.bf16.mxu0 0
        %1833 = vmatpush1.bf16.msra.mxu0 0
        %1834 = vmatprep.subr.bf16.mxu0 0
        %1835 = vmatpush1.bf16.msra.mxu0 0
        %1836 = vmatprep.subr.bf16.mxu0 0
        %1837 = vmatpush1.bf16.msra.mxu0 0
        %1838 = vmatprep.subr.bf16.mxu0 0
        %1839 = vmatpush1.bf16.msra.mxu0 0
        %1840 = vmatprep.subr.bf16.mxu0 0
        %1841 = vmatpush1.bf16.msra.mxu0 0
        %1842 = vmatprep.subr.bf16.mxu0 0
        %1843 = vmatpush1.bf16.msra.mxu0 0
        %1844 = vmatprep.subr.bf16.mxu0 0
        %1845 = vmatpush1.bf16.msra.mxu0 0
        %1846 = vmatprep.subr.bf16.mxu0 0
        %1847 = vmatpush1.bf16.msra.mxu0 0
        %1848 = vmatprep.subr.bf16.mxu0 0
        %1849 = vmatpush1.bf16.msra.mxu0 0
        %1850 = vmatprep.mubr.bf16.mxu0 0
        %1851 = vmatmul.mubr.bf16.gmra.mrb[0].mxu0 %v1813
        %v1852 = vpop.f32.mrb[0].mxu0
        %v1853 = vadd.f32 0.0, %v1852
        %v1854 = vpop.f32.mrb[0].mxu0
        %v1855 = vpop.f32.mrb[0].mxu0
        %v1856 = vpop.f32.mrb[0].mxu0
        %1857 = vdwg.mxu0
        %v1859 = vsel %vm1484, %v1579, 0
        %v1862 = vsel %vm1584, %v1113, 0
        %1864 = vmatprep.subr.bf16.mxu0 0
        %1865 = vmatpush1.bf16.msra.mxu0 %v1862
        %1866 = vmatprep.subr.bf16.mxu0 0
        %1867 = vmatpush1.bf16.msra.mxu0 0
        %1868 = vmatprep.subr.bf16.mxu0 0
        %1869 = vmatpush1.bf16.msra.mxu0 0
        %1870 = vmatprep.subr.bf16.mxu0 0
        %1871 = vmatpush1.bf16.msra.mxu0 0
        %1872 = vmatprep.subr.bf16.mxu0 0
        %1873 = vmatpush1.bf16.msra.mxu0 0
        %1874 = vmatprep.subr.bf16.mxu0 0
        %1875 = vmatpush1.bf16.msra.mxu0 0
        %1876 = vmatprep.subr.bf16.mxu0 0
        %1877 = vmatpush1.bf16.msra.mxu0 0
        %1878 = vmatprep.subr.bf16.mxu0 0
        %1879 = vmatpush1.bf16.msra.mxu0 0
        %1880 = vmatprep.subr.bf16.mxu0 0
        %1881 = vmatpush1.bf16.msra.mxu0 0
        %1882 = vmatprep.subr.bf16.mxu0 0
        %1883 = vmatpush1.bf16.msra.mxu0 0
        %1884 = vmatprep.subr.bf16.mxu0 0
        %1885 = vmatpush1.bf16.msra.mxu0 0
        %1886 = vmatprep.subr.bf16.mxu0 0
        %1887 = vmatpush1.bf16.msra.mxu0 0
        %1888 = vmatprep.subr.bf16.mxu0 0
        %1889 = vmatpush1.bf16.msra.mxu0 0
        %1890 = vmatprep.subr.bf16.mxu0 0
        %1891 = vmatpush1.bf16.msra.mxu0 0
        %1892 = vmatprep.subr.bf16.mxu0 0
        %1893 = vmatpush1.bf16.msra.mxu0 0
        %1894 = vmatprep.subr.bf16.mxu0 0
        %1895 = vmatpush1.bf16.msra.mxu0 0
        %1896 = vmatprep.mubr.bf16.mxu0 0
        %1897 = vmatmul.mubr.bf16.gmra.mrb[0].mxu0 %v1859
        %v1898 = vpop.f32.mrb[0].mxu0
        %v1899 = vadd.f32 0.0, %v1898
        %v1900 = vpop.f32.mrb[0].mxu0
        %v1901 = vpop.f32.mrb[0].mxu0
        %v1902 = vpop.f32.mrb[0].mxu0
        %1903 = vdwg.mxu0
        %v1905 = vsel %vm1484, %v1580, 0
        %v1908 = vsel %vm1584, %v1114, 0
        %1910 = vmatprep.subr.bf16.mxu0 0
        %1911 = vmatpush1.bf16.msra.mxu0 %v1908
        %1912 = vmatprep.subr.bf16.mxu0 0
        %1913 = vmatpush1.bf16.msra.mxu0 0
        %1914 = vmatprep.subr.bf16.mxu0 0
        %1915 = vmatpush1.bf16.msra.mxu0 0
        %1916 = vmatprep.subr.bf16.mxu0 0
        %1917 = vmatpush1.bf16.msra.mxu0 0
        %1918 = vmatprep.subr.bf16.mxu0 0
        %1919 = vmatpush1.bf16.msra.mxu0 0
        %1920 = vmatprep.subr.bf16.mxu0 0
        %1921 = vmatpush1.bf16.msra.mxu0 0
        %1922 = vmatprep.subr.bf16.mxu0 0
        %1923 = vmatpush1.bf16.msra.mxu0 0
        %1924 = vmatprep.subr.bf16.mxu0 0
        %1925 = vmatpush1.bf16.msra.mxu0 0
        %1926 = vmatprep.subr.bf16.mxu0 0
        %1927 = vmatpush1.bf16.msra.mxu0 0
        %1928 = vmatprep.subr.bf16.mxu0 0
        %1929 = vmatpush1.bf16.msra.mxu0 0
        %1930 = vmatprep.subr.bf16.mxu0 0
        %1931 = vmatpush1.bf16.msra.mxu0 0
        %1932 = vmatprep.subr.bf16.mxu0 0
        %1933 = vmatpush1.bf16.msra.mxu0 0
        %1934 = vmatprep.subr.bf16.mxu0 0
        %1935 = vmatpush1.bf16.msra.mxu0 0
        %1936 = vmatprep.subr.bf16.mxu0 0
        %1937 = vmatpush1.bf16.msra.mxu0 0
        %1938 = vmatprep.subr.bf16.mxu0 0
        %1939 = vmatpush1.bf16.msra.mxu0 0
        %1940 = vmatprep.subr.bf16.mxu0 0
        %1941 = vmatpush1.bf16.msra.mxu0 0
        %1942 = vmatprep.mubr.bf16.mxu0 0
        %1943 = vmatmul.mubr.bf16.gmra.mrb[0].mxu0 %v1905
        %v1944 = vpop.f32.mrb[0].mxu0
        %v1945 = vadd.f32 0.0, %v1944
        %v1946 = vpop.f32.mrb[0].mxu0
        %v1947 = vpop.f32.mrb[0].mxu0
        %v1948 = vpop.f32.mrb[0].mxu0
        %1949 = vdwg.mxu0
        %1951 = vrot.lane.b32.xlu0 %v1669, 32
        %v1952 = vpop.permute.xlu0 %1951
        %1955 = vrot.lane.b32.xlu0 %v1715, 64
        %v1956 = vpop.permute.xlu0 %1955
        %1959 = vrot.lane.b32.xlu0 %v1761, 96
        %v1960 = vpop.permute.xlu0 %1959
        %v1962 = vsel %vm1115, %v1623, %v1952
        %vm1963 = vcmask 523264
        %v1964 = vsel %vm1963, %v1962, %v1956
        %vm1965 = vcmask 785408
        %v1966 = vsel %vm1965, %v1964, %v1960
        %1968 = vrot.lane.b32.xlu0 %v1853, 32
        %v1969 = vpop.permute.xlu0 %1968
        %1972 = vrot.lane.b32.xlu0 %v1899, 64
        %v1973 = vpop.permute.xlu0 %1972
        %1976 = vrot.lane.b32.xlu0 %v1945, 96
        %v1977 = vpop.permute.xlu0 %1976
        %v1979 = vsel %vm1115, %v1807, %v1969
        %v1980 = vsel %vm1963, %v1979, %v1973
        %v1981 = vsel %vm1965, %v1980, %v1977
        %v1982 = vpack.c.bf16 %v1981, %v1966
        %v1983 = vld [vmem:[%s628] sm:$0xf]
        %v1984 = vld [vmem:[%s628 + $0x4] sm:$0xf]
        %v1985 = vld [vmem:[%s628 + $0x8] sm:$0xf]
        %v1986 = vld [vmem:[%s628 + $0xc] sm:$0xf]
        %v1987 = vld [vmem:[%s628 + $0x10] sm:$0xf]
        %v1988 = vld [vmem:[%s628 + $0x14] sm:$0xf]
        %v1989 = vld [vmem:[%s628 + $0x18] sm:$0xf]
        %v1990 = vld [vmem:[%s628 + $0x1c] sm:$0xf]
        %v1991 = vld [vmem:[%s628 + $0x20] sm:$0xf]
        %v1992 = vld [vmem:[%s628 + $0x24] sm:$0xf]
        %v1993 = vld [vmem:[%s628 + $0x28] sm:$0xf]
        %v1994 = vld [vmem:[%s628 + $0x2c] sm:$0xf]
        %v1995 = vld [vmem:[%s628 + $0x30] sm:$0xf]
        %v1996 = vld [vmem:[%s628 + $0x34] sm:$0xf]
        %v1997 = vld [vmem:[%s628 + $0x38] sm:$0xf]
        %v1998 = vld [vmem:[%s628 + $0x3c] sm:$0xf]
        %v1999 = vld [vmem:[%s734] sm:$0x1]
        %v2001 = vlaneseq
        %v2002 = vshrl.u32 %v2001, 7
        %v2003 = vsub.s32 0, %v2002
        %v2004 = vrot.slane %v1999, %v2003
        %v2022 = vunpack.c.l.b16 %v1983
        %v2023 = vunpack.c.l.b16 %v1984
        %v2024 = vunpack.c.l.b16 %v1985
        %v2025 = vunpack.c.l.b16 %v1986
        %v2026 = vunpack.c.l.b16 %v1987
        %v2027 = vunpack.c.l.b16 %v1988
        %v2028 = vunpack.c.l.b16 %v1989
        %v2029 = vunpack.c.l.b16 %v1990
        %v2030 = vunpack.c.l.b16 %v1991
        %v2031 = vunpack.c.l.b16 %v1992
        %v2032 = vunpack.c.l.b16 %v1993
        %v2033 = vunpack.c.l.b16 %v1994
        %v2034 = vunpack.c.l.b16 %v1995
        %v2035 = vunpack.c.l.b16 %v1996
        %v2036 = vunpack.c.l.b16 %v1997
        %v2037 = vunpack.c.l.b16 %v1998
        %v2038 = vpack.c.b16 %v2023, %v2022
        %v2039 = vpack.c.b16 %v2025, %v2024
        %v2040 = vpack.c.b16 %v2027, %v2026
        %v2041 = vpack.c.b16 %v2029, %v2028
        %v2042 = vpack.c.b16 %v2031, %v2030
        %v2043 = vpack.c.b16 %v2033, %v2032
        %v2044 = vpack.c.b16 %v2035, %v2034
        %v2045 = vpack.c.b16 %v2037, %v2036
        %2054 = vmatprep.subr.bf16.mxu0 0
        %2055 = vmatpush1.bf16.msra.mxu0 %v2038
        %2056 = vmatprep.subr.bf16.mxu0 0
        %2057 = vmatpush1.bf16.msra.mxu0 %v2039
        %2058 = vmatprep.subr.bf16.mxu0 0
        %2059 = vmatpush1.bf16.msra.mxu0 %v2040
        %2060 = vmatprep.subr.bf16.mxu0 0
        %2061 = vmatpush1.bf16.msra.mxu0 %v2041
        %2062 = vmatprep.subr.bf16.mxu0 0
        %2063 = vmatpush1.bf16.msra.mxu0 %v2042
        %2064 = vmatprep.subr.bf16.mxu0 0
        %2065 = vmatpush1.bf16.msra.mxu0 %v2043
        %2066 = vmatprep.subr.bf16.mxu0 0
        %2067 = vmatpush1.bf16.msra.mxu0 %v2044
        %2068 = vmatprep.subr.bf16.mxu0 0
        %2069 = vmatpush1.bf16.msra.mxu0 %v2045
        %2070 = vmatprep.subr.bf16.mxu0 0
        %2071 = vmatpush1.bf16.msra.mxu0 0
        %2072 = vmatprep.subr.bf16.mxu0 0
        %2073 = vmatpush1.bf16.msra.mxu0 0
        %2074 = vmatprep.subr.bf16.mxu0 0
        %2075 = vmatpush1.bf16.msra.mxu0 0
        %2076 = vmatprep.subr.bf16.mxu0 0
        %2077 = vmatpush1.bf16.msra.mxu0 0
        %2078 = vmatprep.subr.bf16.mxu0 0
        %2079 = vmatpush1.bf16.msra.mxu0 0
        %2080 = vmatprep.subr.bf16.mxu0 0
        %2081 = vmatpush1.bf16.msra.mxu0 0
        %2082 = vmatprep.subr.bf16.mxu0 0
        %2083 = vmatpush1.bf16.msra.mxu0 0
        %2084 = vmatprep.subr.bf16.mxu0 0
        %2085 = vmatpush1.bf16.msra.mxu0 0
        %2086 = vmatprep.mubr.bf16.mxu0 0
        %2087 = vmatmul.mubr.bf16.gmra.mrb[0].mxu0 %v1982
        %v2088 = vpop.f32.mrb[0].mxu0
        %v2089 = vadd.f32 %v2004, %v2088
        %v2090 = vpop.f32.mrb[0].mxu0
        %v2091 = vpop.f32.mrb[0].mxu0
        %v2092 = vadd.f32 %v2004, %v2091
        %v2093 = vpop.f32.mrb[0].mxu0
        %2094 = vdwg.mxu0
        %v2095 = vadd.f32 %v767, %v2089
        %v2096 = vadd.f32 %v768, %v2092
        %2097 = vadd.xlane.f32.xlu0 %v2095
        %v2098 = vpop.xlane.xlu0 %2097
        %2099 = vadd.xlane.f32.xlu0 %v2096
        %v2100 = vpop.xlane.xlu0 %2099
        %v2101 = vrcp.pop 128.0
        %v2102 = vmul.f32 %v2098, %v2101
        %v2103 = vmul.f32 %v2100, %v2101
        %v2104 = vsub.f32 %v2095, %v2102
        %v2105 = vsub.f32 %v2096, %v2103
        %v2106 = vmul.f32 %v2104, %v2104
        %v2107 = vmul.f32 %v2105, %v2105
        %2108 = vadd.xlane.f32.xlu0 %v2106
        %v2109 = vpop.xlane.xlu0 %2108
        %2110 = vadd.xlane.f32.xlu0 %v2107
        %v2111 = vpop.xlane.xlu0 %2110
        %v2112 = vmul.f32 %v2109, %v2101
        %v2113 = vmul.f32 %v2111, %v2101
        %v2114 = vadd.f32 %v2112, 1e-05
        %v2115 = vadd.f32 %v2113, 1e-05
        %v2116 = vrsqrt.pop %v2114
        %v2117 = vrsqrt.pop %v2115
        %v2118 = vmul.f32 %v2104, %v2116
        %v2119 = vmul.f32 %v2105, %v2117
        %v2120 = vld [vmem:[%s744] sm:$0x1]
        %v2122 = vlaneseq
        %v2123 = vshrl.u32 %v2122, 7
        %v2124 = vsub.s32 0, %v2123
        %v2125 = vrot.slane %v2120, %v2124
        %v2127 = vmul.f32 %v2118, %v2125
        %v2128 = vmul.f32 %v2119, %v2125
        %v2129 = vld [vmem:[%s747] sm:$0x1]
        %v2131 = vlaneseq
        %v2132 = vshrl.u32 %v2131, 7
        %v2133 = vsub.s32 0, %v2132
        %v2134 = vrot.slane %v2129, %v2133
        %v2136 = vadd.f32 %v2127, %v2134
        %v2137 = vadd.f32 %v2128, %v2134
        %v2138 = vpack.c.bf16 %v2137, %v2136
        %v2139 = vld [vmem:[%s637] sm:$0xff]
        %v2140 = vld [vmem:[%s637 + $0x8] sm:$0xff]
        %v2141 = vld [vmem:[%s637 + $0x10] sm:$0xff]
        %v2142 = vld [vmem:[%s637 + $0x18] sm:$0xff]
        %v2143 = vld [vmem:[%s637 + $0x20] sm:$0xff]
        %v2144 = vld [vmem:[%s637 + $0x28] sm:$0xff]
        %v2145 = vld [vmem:[%s637 + $0x30] sm:$0xff]
        %v2146 = vld [vmem:[%s637 + $0x38] sm:$0xff]
        %v2147 = vld [vmem:[%s637 + $0x40] sm:$0xff]
        %v2148 = vld [vmem:[%s637 + $0x48] sm:$0xff]
        %v2149 = vld [vmem:[%s637 + $0x50] sm:$0xff]
        %v2150 = vld [vmem:[%s637 + $0x58] sm:$0xff]
        %v2151 = vld [vmem:[%s637 + $0x60] sm:$0xff]
        %v2152 = vld [vmem:[%s637 + $0x68] sm:$0xff]
        %v2153 = vld [vmem:[%s637 + $0x70] sm:$0xff]
        %v2154 = vld [vmem:[%s637 + $0x78] sm:$0xff]
        %v2155 = vld [vmem:[%s738] sm:$0x3]
        %v2157 = vlaneseq
        %v2158 = vshrl.u32 %v2157, 7
        %v2159 = vsub.s32 0, %v2158
        %v2160 = vrot.slane %v2155, %v2159
        %v2161 = vlaneseq
        %v2162 = vshrl.u32 %v2161, 7
        %v2163 = vsub.s32 1, %v2162
        %v2164 = vrot.slane %v2155, %v2163
        %v2183 = vunpack.c.l.b16 %v2139
        %v2184 = vunpack.c.h.b16 %v2139
        %v2185 = vunpack.c.l.b16 %v2140
        %v2186 = vunpack.c.h.b16 %v2140
        %v2187 = vunpack.c.l.b16 %v2141
        %v2188 = vunpack.c.h.b16 %v2141
        %v2189 = vunpack.c.l.b16 %v2142
        %v2190 = vunpack.c.h.b16 %v2142
        %v2191 = vunpack.c.l.b16 %v2143
        %v2192 = vunpack.c.h.b16 %v2143
        %v2193 = vunpack.c.l.b16 %v2144
        %v2194 = vunpack.c.h.b16 %v2144
        %v2195 = vunpack.c.l.b16 %v2145
        %v2196 = vunpack.c.h.b16 %v2145
        %v2197 = vunpack.c.l.b16 %v2146
        %v2198 = vunpack.c.h.b16 %v2146
        %v2199 = vunpack.c.l.b16 %v2147
        %v2200 = vunpack.c.h.b16 %v2147
        %v2201 = vunpack.c.l.b16 %v2148
        %v2202 = vunpack.c.h.b16 %v2148
        %v2203 = vunpack.c.l.b16 %v2149
        %v2204 = vunpack.c.h.b16 %v2149
        %v2205 = vunpack.c.l.b16 %v2150
        %v2206 = vunpack.c.h.b16 %v2150
        %v2207 = vunpack.c.l.b16 %v2151
        %v2208 = vunpack.c.h.b16 %v2151
        %v2209 = vunpack.c.l.b16 %v2152
        %v2210 = vunpack.c.h.b16 %v2152
        %v2211 = vunpack.c.l.b16 %v2153
        %v2212 = vunpack.c.h.b16 %v2153
        %v2213 = vunpack.c.l.b16 %v2154
        %v2214 = vunpack.c.h.b16 %v2154
        %v2215 = vpack.c.b16 %v2185, %v2183
        %v2216 = vpack.c.b16 %v2186, %v2184
        %v2217 = vpack.c.b16 %v2189, %v2187
        %v2218 = vpack.c.b16 %v2190, %v2188
        %v2219 = vpack.c.b16 %v2193, %v2191
        %v2220 = vpack.c.b16 %v2194, %v2192
        %v2221 = vpack.c.b16 %v2197, %v2195
        %v2222 = vpack.c.b16 %v2198, %v2196
        %v2223 = vpack.c.b16 %v2201, %v2199
        %v2224 = vpack.c.b16 %v2202, %v2200
        %v2225 = vpack.c.b16 %v2205, %v2203
        %v2226 = vpack.c.b16 %v2206, %v2204
        %v2227 = vpack.c.b16 %v2209, %v2207
        %v2228 = vpack.c.b16 %v2210, %v2208
        %v2229 = vpack.c.b16 %v2213, %v2211
        %v2230 = vpack.c.b16 %v2214, %v2212
        %2247 = vmatprep.subr.bf16.mxu0 %v2216
        %2248 = vmatpush1.bf16.msra.mxu0 %v2215
        %2249 = vmatprep.subr.bf16.mxu0 %v2218
        %2250 = vmatpush1.bf16.msra.mxu0 %v2217
        %2251 = vmatprep.subr.bf16.mxu0 %v2220
        %2252 = vmatpush1.bf16.msra.mxu0 %v2219
        %2253 = vmatprep.subr.bf16.mxu0 %v2222
        %2254 = vmatpush1.bf16.msra.mxu0 %v2221
        %2255 = vmatprep.subr.bf16.mxu0 %v2224
        %2256 = vmatpush1.bf16.msra.mxu0 %v2223
        %2257 = vmatprep.subr.bf16.mxu0 %v2226
        %2258 = vmatpush1.bf16.msra.mxu0 %v2225
        %2259 = vmatprep.subr.bf16.mxu0 %v2228
        %2260 = vmatpush1.bf16.msra.mxu0 %v2227
        %2261 = vmatprep.subr.bf16.mxu0 %v2230
        %2262 = vmatpush1.bf16.msra.mxu0 %v2229
        %2263 = vmatprep.subr.bf16.mxu0 0
        %2264 = vmatpush1.bf16.msra.mxu0 0
        %2265 = vmatprep.subr.bf16.mxu0 0
        %2266 = vmatpush1.bf16.msra.mxu0 0
        %2267 = vmatprep.subr.bf16.mxu0 0
        %2268 = vmatpush1.bf16.msra.mxu0 0
        %2269 = vmatprep.subr.bf16.mxu0 0
        %2270 = vmatpush1.bf16.msra.mxu0 0
        %2271 = vmatprep.subr.bf16.mxu0 0
        %2272 = vmatpush1.bf16.msra.mxu0 0
        %2273 = vmatprep.subr.bf16.mxu0 0
        %2274 = vmatpush1.bf16.msra.mxu0 0
        %2275 = vmatprep.subr.bf16.mxu0 0
        %2276 = vmatpush1.bf16.msra.mxu0 0
        %2277 = vmatprep.subr.bf16.mxu0 0
        %2278 = vmatpush1.bf16.msra.mxu0 0
        %2279 = vmatprep.mubr.bf16.mxu0 0
        %2280 = vmatmul.mubr.bf16.gmra.mrb[0].mxu0 %v2138
        %v2281 = vpop.f32.mrb[0].mxu0
        %v2282 = vadd.f32 %v2160, %v2281
        %v2283 = vpop.f32.mrb[0].mxu0
        %v2284 = vadd.f32 %v2164, %v2283
        %v2285 = vpop.f32.mrb[0].mxu0
        %v2286 = vadd.f32 %v2160, %v2285
        %v2287 = vpop.f32.mrb[0].mxu0
        %v2288 = vadd.f32 %v2164, %v2287
        %2289 = vdwg.mxu0
        %v2290 = vmax.f32 %v2282, 0.0
        %v2291 = vmax.f32 %v2284, 0.0
        %v2292 = vmax.f32 %v2286, 0.0
        %v2293 = vmax.f32 %v2288, 0.0
        %v2294 = vpack.c.bf16 %v2292, %v2290
        %v2295 = vpack.c.bf16 %v2293, %v2291
        %v2296 = vld [vmem:[%s646] sm:$0xf]
        %v2297 = vld [vmem:[%s646 + $0x4] sm:$0xf]
        %v2298 = vld [vmem:[%s646 + $0x8] sm:$0xf]
        %v2299 = vld [vmem:[%s646 + $0xc] sm:$0xf]
        %v2300 = vld [vmem:[%s646 + $0x10] sm:$0xf]
        %v2301 = vld [vmem:[%s646 + $0x14] sm:$0xf]
        %v2302 = vld [vmem:[%s646 + $0x18] sm:$0xf]
        %v2303 = vld [vmem:[%s646 + $0x1c] sm:$0xf]
        %v2304 = vld [vmem:[%s646 + $0x20] sm:$0xf]
        %v2305 = vld [vmem:[%s646 + $0x24] sm:$0xf]
        %v2306 = vld [vmem:[%s646 + $0x28] sm:$0xf]
        %v2307 = vld [vmem:[%s646 + $0x2c] sm:$0xf]
        %v2308 = vld [vmem:[%s646 + $0x30] sm:$0xf]
        %v2309 = vld [vmem:[%s646 + $0x34] sm:$0xf]
        %v2310 = vld [vmem:[%s646 + $0x38] sm:$0xf]
        %v2311 = vld [vmem:[%s646 + $0x3c] sm:$0xf]
        %v2312 = vld [vmem:[%s646 + $0x40] sm:$0xf]
        %v2313 = vld [vmem:[%s646 + $0x44] sm:$0xf]
        %v2314 = vld [vmem:[%s646 + $0x48] sm:$0xf]
        %v2315 = vld [vmem:[%s646 + $0x4c] sm:$0xf]
        %v2316 = vld [vmem:[%s646 + $0x50] sm:$0xf]
        %v2317 = vld [vmem:[%s646 + $0x54] sm:$0xf]
        %v2318 = vld [vmem:[%s646 + $0x58] sm:$0xf]
        %v2319 = vld [vmem:[%s646 + $0x5c] sm:$0xf]
        %v2320 = vld [vmem:[%s646 + $0x60] sm:$0xf]
        %v2321 = vld [vmem:[%s646 + $0x64] sm:$0xf]
        %v2322 = vld [vmem:[%s646 + $0x68] sm:$0xf]
        %v2323 = vld [vmem:[%s646 + $0x6c] sm:$0xf]
        %v2324 = vld [vmem:[%s646 + $0x70] sm:$0xf]
        %v2325 = vld [vmem:[%s646 + $0x74] sm:$0xf]
        %v2326 = vld [vmem:[%s646 + $0x78] sm:$0xf]
        %v2327 = vld [vmem:[%s646 + $0x7c] sm:$0xf]
        %v2328 = vld [vmem:[%s741] sm:$0x1]
        %v2330 = vlaneseq
        %v2331 = vshrl.u32 %v2330, 7
        %v2332 = vsub.s32 0, %v2331
        %v2333 = vrot.slane %v2328, %v2332
        %v2367 = vunpack.c.l.b16 %v2296
        %v2368 = vunpack.c.l.b16 %v2297
        %v2369 = vunpack.c.l.b16 %v2298
        %v2370 = vunpack.c.l.b16 %v2299
        %v2371 = vunpack.c.l.b16 %v2300
        %v2372 = vunpack.c.l.b16 %v2301
        %v2373 = vunpack.c.l.b16 %v2302
        %v2374 = vunpack.c.l.b16 %v2303
        %v2375 = vunpack.c.l.b16 %v2304
        %v2376 = vunpack.c.l.b16 %v2305
        %v2377 = vunpack.c.l.b16 %v2306
        %v2378 = vunpack.c.l.b16 %v2307
        %v2379 = vunpack.c.l.b16 %v2308
        %v2380 = vunpack.c.l.b16 %v2309
        %v2381 = vunpack.c.l.b16 %v2310
        %v2382 = vunpack.c.l.b16 %v2311
        %v2383 = vunpack.c.l.b16 %v2312
        %v2384 = vunpack.c.l.b16 %v2313
        %v2385 = vunpack.c.l.b16 %v2314
        %v2386 = vunpack.c.l.b16 %v2315
        %v2387 = vunpack.c.l.b16 %v2316
        %v2388 = vunpack.c.l.b16 %v2317
        %v2389 = vunpack.c.l.b16 %v2318
        %v2390 = vunpack.c.l.b16 %v2319
        %v2391 = vunpack.c.l.b16 %v2320
        %v2392 = vunpack.c.l.b16 %v2321
        %v2393 = vunpack.c.l.b16 %v2322
        %v2394 = vunpack.c.l.b16 %v2323
        %v2395 = vunpack.c.l.b16 %v2324
        %v2396 = vunpack.c.l.b16 %v2325
        %v2397 = vunpack.c.l.b16 %v2326
        %v2398 = vunpack.c.l.b16 %v2327
        %v2399 = vpack.c.b16 %v2368, %v2367
        %v2400 = vpack.c.b16 %v2370, %v2369
        %v2401 = vpack.c.b16 %v2372, %v2371
        %v2402 = vpack.c.b16 %v2374, %v2373
        %v2403 = vpack.c.b16 %v2376, %v2375
        %v2404 = vpack.c.b16 %v2378, %v2377
        %v2405 = vpack.c.b16 %v2380, %v2379
        %v2406 = vpack.c.b16 %v2382, %v2381
        %v2407 = vpack.c.b16 %v2384, %v2383
        %v2408 = vpack.c.b16 %v2386, %v2385
        %v2409 = vpack.c.b16 %v2388, %v2387
        %v2410 = vpack.c.b16 %v2390, %v2389
        %v2411 = vpack.c.b16 %v2392, %v2391
        %v2412 = vpack.c.b16 %v2394, %v2393
        %v2413 = vpack.c.b16 %v2396, %v2395
        %v2414 = vpack.c.b16 %v2398, %v2397
        %2431 = vmatprep.subr.bf16.mxu0 0
        %2432 = vmatpush1.bf16.msra.mxu0 %v2399
        %2433 = vmatprep.subr.bf16.mxu0 0
        %2434 = vmatpush1.bf16.msra.mxu0 %v2400
        %2435 = vmatprep.subr.bf16.mxu0 0
        %2436 = vmatpush1.bf16.msra.mxu0 %v2401
        %2437 = vmatprep.subr.bf16.mxu0 0
        %2438 = vmatpush1.bf16.msra.mxu0 %v2402
        %2439 = vmatprep.subr.bf16.mxu0 0
        %2440 = vmatpush1.bf16.msra.mxu0 %v2403
        %2441 = vmatprep.subr.bf16.mxu0 0
        %2442 = vmatpush1.bf16.msra.mxu0 %v2404
        %2443 = vmatprep.subr.bf16.mxu0 0
        %2444 = vmatpush1.bf16.msra.mxu0 %v2405
        %2445 = vmatprep.subr.bf16.mxu0 0
        %2446 = vmatpush1.bf16.msra.mxu0 %v2406
        %2447 = vmatprep.subr.bf16.mxu0 0
        %2448 = vmatpush1.bf16.msra.mxu0 %v2407
        %2449 = vmatprep.subr.bf16.mxu0 0
        %2450 = vmatpush1.bf16.msra.mxu0 %v2408
        %2451 = vmatprep.subr.bf16.mxu0 0
        %2452 = vmatpush1.bf16.msra.mxu0 %v2409
        %2453 = vmatprep.subr.bf16.mxu0 0
        %2454 = vmatpush1.bf16.msra.mxu0 %v2410
        %2455 = vmatprep.subr.bf16.mxu0 0
        %2456 = vmatpush1.bf16.msra.mxu0 %v2411
        %2457 = vmatprep.subr.bf16.mxu0 0
        %2458 = vmatpush1.bf16.msra.mxu0 %v2412
        %2459 = vmatprep.subr.bf16.mxu0 0
        %2460 = vmatpush1.bf16.msra.mxu0 %v2413
        %2461 = vmatprep.subr.bf16.mxu0 0
        %2462 = vmatpush1.bf16.msra.mxu0 %v2414
        %2463 = vmatprep.mubr.bf16.mxu0 %v2295
        %2464 = vmatmul.mubr.bf16.gmra.mrb[0].mxu0 %v2294
        %v2465 = vpop.f32.mrb[0].mxu0
        %v2466 = vadd.f32 %v2333, %v2465
        %v2467 = vpop.f32.mrb[0].mxu0
        %v2468 = vpop.f32.mrb[0].mxu0
        %v2469 = vadd.f32 %v2333, %v2468
        %v2470 = vpop.f32.mrb[0].mxu0
        %2471 = vdwg.mxu0
        %v2472 = vadd.f32 %v2136, %v2466
        %v2473 = vadd.f32 %v2137, %v2469
        %2474 = vadd.xlane.f32.xlu0 %v2472
        %v2475 = vpop.xlane.xlu0 %2474
        %2476 = vadd.xlane.f32.xlu0 %v2473
        %v2477 = vpop.xlane.xlu0 %2476
        %v2478 = vmul.f32 %v2475, %v2101
        %v2479 = vmul.f32 %v2477, %v2101
        %v2480 = vsub.f32 %v2472, %v2478
        %v2481 = vsub.f32 %v2473, %v2479
        %v2482 = vmul.f32 %v2480, %v2480
        %v2483 = vmul.f32 %v2481, %v2481
        %2484 = vadd.xlane.f32.xlu0 %v2482
        %v2485 = vpop.xlane.xlu0 %2484
        %2486 = vadd.xlane.f32.xlu0 %v2483
        %v2487 = vpop.xlane.xlu0 %2486
        %v2488 = vmul.f32 %v2485, %v2101
        %v2489 = vmul.f32 %v2487, %v2101
        %v2490 = vadd.f32 %v2488, 1e-05
        %v2491 = vadd.f32 %v2489, 1e-05
        %v2492 = vrsqrt.pop %v2490
        %v2493 = vrsqrt.pop %v2491
        %v2494 = vmul.f32 %v2480, %v2492
        %v2495 = vmul.f32 %v2481, %v2493
        %v2496 = vld [vmem:[%s750] sm:$0x1]
        %v2498 = vlaneseq
        %v2499 = vshrl.u32 %v2498, 7
        %v2500 = vsub.s32 0, %v2499
        %v2501 = vrot.slane %v2496, %v2500
        %v2503 = vmul.f32 %v2494, %v2501
        %v2504 = vmul.f32 %v2495, %v2501
        %v2505 = vld [vmem:[%s753] sm:$0x1]
        %v2507 = vlaneseq
        %v2508 = vshrl.u32 %v2507, 7
        %v2509 = vsub.s32 0, %v2508
        %v2510 = vrot.slane %v2505, %v2509
        %v2512 = vadd.f32 %v2503, %v2510
        %v2513 = vadd.f32 %v2504, %v2510
        %2514 = vst [vmem:[#allocation2] sm:$0xff] %v2512
        %2515 = vst [vmem:[#allocation2 + $0x8] sm:$0xff] %v2513
        %p2516 = scmp.eq.s32.totalorder %s33, 1
        // Predicated region
        $region105: #{tpu_custom_call.1} parent=75 // pred_check
          %p2517 = pneg %p2516
        $region106: #{tpu_custom_call.1} parent=75 // pred_check_branch
          %2519 = sbr.rel (%p2517) target = $region108
        $region107: #{tpu_custom_call.1} parent=75 // pred_region
          %2520 = vst [vmem:[#allocation12] sm:$0xff] %v2512
          %2521 = vst [vmem:[#allocation12 + $0x8] sm:$0xff] %v2513
        $region108: #{tpu_custom_call.1} parent=75 // pred_fallthru
          _
        // Predicated region
        $region109: #{tpu_custom_call.1} parent=75 // pred_check
          %p2522 = pneg %p417
        $region110: #{tpu_custom_call.1} parent=75 // pred_check_branch
          %2524 = sbr.rel (%p2522) target = $region112
        $region111: #{tpu_custom_call.1} parent=75 // pred_region
          %s2525 = smul.u32 2, %s32
          %s2527 = ssub.s32 256, 256
          %2528 = vsyncadd [#allocation5], %s2527
          %s2529 = smul.addr %s2525, 128
          %s2530 = scalar_lea.hbm %s14, %s2529
          %s2531 = sshll.u32 [#allocation12], 4
          %s2532 = int_to_ptr.vmem [resolvable:$true] %s2531
          %2537 = dma.vmem_to_hbm [thread:$0]  %s2532, 256, %s2530, [#allocation5], 128, 128, 8
        $region112: #{tpu_custom_call.1} parent=75 // pred_fallthru
          _
        // Predicated region
        $region113: #{tpu_custom_call.1} parent=75 // pred_check
          %p2538 = pneg %p417
        $region114: #{tpu_custom_call.1} parent=75 // pred_check_branch
          %2540 = sbr.rel (%p2538) target = $region116
        $region115: #{tpu_custom_call.1} parent=75 // pred_region
          %2541 = dma.done [#allocation5], 256
        $region116: #{tpu_custom_call.1} parent=75 // pred_fallthru
          _
      $region76: #{tpu_custom_call.1} parent=5 // pred_fallthru
        _
      %p2542 = scmp.le.s32.totalorder 2, %s23
      // Predicated region
      $region117: #{tpu_custom_call.1} parent=5 // pred_check
        %p2543 = pneg %p2542
      $region118: #{tpu_custom_call.1} parent=5 // pred_check_branch
        %2545 = sbr.rel (%p2543) target = $region120
      $region119: #{tpu_custom_call.1} parent=5 // pred_region
        %s2546 = ssub.s32 %s23, 2
      $region120: #{tpu_custom_call.1} parent=5 // pred_fallthru
        _
    $region6: #{tpu_custom_call.1} parent=1 // loop_footer
      %s27 = sadd.s32 1, %s23
    $region7: #{tpu_custom_call.1} parent=1 // loop_footer_branch
      %22 = sbr.rel target = $region3
    $region8: #{tpu_custom_call.1} parent=1 // loop_exit
      _
    %2547 = vsyncpa [#allocation4], 1
    %s2548 = scalar_lea.sflag [#allocation4], 1
    %2549 = vsyncpa %s2548, 1
    %2550 = vsyncpa [#allocation7], 1
    %2551 = vsyncpa [#allocation5], 1
    %s2552 = scalar_lea.sflag [#allocation5], 1
    %2553 = vsyncpa %s2552, 1

</llo_original>
